<compile_context>
chip_gen: v5e
topology: v5e:2x2
jax: 0.10.0
libtpu: 0.0.40
codegen_flags: <defaults>
</compile_context>

<pallas_src>
import functools

import jax
import jax.numpy as jnp
from jax.experimental import pallas as pl
from jax.experimental.pallas import tpu as pltpu

# ----------------------- scaled-down DistilBERT config -----------------------
VOCAB = 128
MAX_POS = 64
H = 64          # hidden size (stands in for 768)
N_HEADS = 4
D_HEAD = H // N_HEADS
FFN = 128       # stands in for 3072
N_LAYERS = 2    # stands in for 6
N_CLASSES = 6
EPS = 1e-12


# ------------------------------ in-kernel helpers -----------------------------
def _ln(x, gamma, beta):
    """LayerNorm over the last (lane) dim, f32 math."""
    mu = jnp.mean(x, axis=-1, keepdims=True)
    var = jnp.mean((x - mu) ** 2, axis=-1, keepdims=True)
    return (x - mu) * jax.lax.rsqrt(var + EPS) * gamma + beta


# ------------------------- fused transformer block ----------------------------
def _block_kernel(x_ref, mask_ref, wqkv_ref, bqkv_ref, wo_ref, bo_ref,
                  ln1_ref, wff1_ref, bff1_ref, wff2_ref, bff2_ref, ln2_ref,
                  o_ref, *, n_heads, d_head, b_blk, seq_len):
    """One full DistilBERT block for a batch block, activations resident in VMEM."""
    Hh = n_heads * d_head
    M = b_blk * seq_len

    x = x_ref[...]                                  # (B, L, H) bf16
    xf = x.reshape(M, Hh)                           # (M, H) bf16 (leading merge)
    mask = mask_ref[...]                            # (B, 1, L) additive key mask

    # --- fused QKV projection: one bf16 MXU pass, M = B*L rows.
    # 1/sqrt(d_head) is already folded into the Q columns of wqkv / bqkv.
    qkv = jnp.dot(xf, wqkv_ref[...],
                  preferred_element_type=jnp.float32) + bqkv_ref[...]   # (M, 3H)

    # --- attention: heads unrolled, score/ctx matmuls batched over the batch dim.
    ctx_heads = []
    for h in range(n_heads):
        lo = h * d_head
        hi = lo + d_head
        q = qkv[:, lo:hi].reshape(b_blk, seq_len, d_head).astype(jnp.bfloat16)
        k = qkv[:, Hh + lo:Hh + hi].reshape(b_blk, seq_len, d_head).astype(jnp.bfloat16)
        v = qkv[:, 2 * Hh + lo:2 * Hh + hi].reshape(b_blk, seq_len, d_head).astype(jnp.bfloat16)
        s = jnp.einsum('bld,bmd->blm', q, k,
                       preferred_element_type=jnp.float32)              # (B, L, L)
        s = s + mask                                                    # key mask
        m = jnp.max(s, axis=-1, keepdims=True)
        p = jnp.exp(s - m)
        p = p * pl.reciprocal(jnp.sum(p, axis=-1, keepdims=True), approx=True)
        ctx = jnp.einsum('blm,bmd->bld', p.astype(jnp.bfloat16), v,
                         preferred_element_type=jnp.float32)            # (B, L, Dh)
        ctx_heads.append(ctx.reshape(M, d_head))

    # --- single full-K output projection over all heads at once ---
    ctx_all = jnp.concatenate(ctx_heads, axis=-1)                       # (M, H) f32
    attn = jnp.dot(ctx_all.astype(jnp.bfloat16), wo_ref[...],
                   preferred_element_type=jnp.float32) + bo_ref[...]    # (M, H)

    # --- residual + LN1 (f32 math) ---
    x1 = _ln(xf.astype(jnp.float32) + attn, ln1_ref[0:1, :], ln1_ref[1:2, :])

    # --- GELU FFN ---
    # TODO(synk): HF DistilBERT uses exact erf GELU; tanh approximation used here.
    f = jnp.dot(x1.astype(jnp.bfloat16), wff1_ref[...],
                preferred_element_type=jnp.float32) + bff1_ref[...]
    f = jax.nn.gelu(f)
    f = jnp.dot(f.astype(jnp.bfloat16), wff2_ref[...],
                preferred_element_type=jnp.float32) + bff2_ref[...]

    # --- residual + LN2, store bf16 activations ---
    x2 = _ln(x1 + f, ln2_ref[0:1, :], ln2_ref[1:2, :])
    o_ref[...] = x2.reshape(b_blk, seq_len, Hh).astype(o_ref.dtype)


def transformer_block(x, mask_add, lp):
    """x: (B, L, H) bf16, mask_add: (B, 1, L) f32 additive key mask -> (B, L, H) bf16."""
    B, L, Hh = x.shape
    b_blk = B                 # whole batch stacked into matmul M rows (grid of 1 step)
    n_blocks = B // b_blk
    M = b_blk * L
    kernel = functools.partial(_block_kernel, n_heads=N_HEADS, d_head=D_HEAD,
                               b_blk=b_blk, seq_len=L)

    flops = n_blocks * (2 * M * Hh * 3 * Hh                 # fused qkv
                        + 4 * b_blk * N_HEADS * L * L * D_HEAD  # scores + ctx
                        + 2 * M * Hh * Hh                   # out proj
                        + 4 * M * Hh * FFN)                 # ffn
    transcendentals = n_blocks * (b_blk * N_HEADS * L * L + M * FFN)
    bytes_accessed = (2 * B * L * Hh * 2                                # x in + out (bf16)
                      + n_blocks * 2 * (Hh * 3 * Hh + Hh * Hh + 2 * Hh * FFN)  # bf16 weights
                      + n_blocks * 4 * (3 * Hh + Hh + FFN + Hh + 4 * Hh)       # f32 bias/LN
                      + 4 * B * L)                                      # mask

    # NOTE: with a single-step grid, weight BlockSpecs are not double-buffered
    # across iterations; at real sizes with a K-tiling grid axis, mark them
    # pipeline_mode=pl.Buffered(1) and set vmem_limit_bytes explicitly.
    return pl.pallas_call(
        kernel,
        out_shape=jax.ShapeDtypeStruct((B, L, Hh), jnp.bfloat16),
        grid=(n_blocks,),
        in_specs=[
            pl.BlockSpec((b_blk, L, Hh), lambda b: (b, 0, 0)),       # x (bf16)
            pl.BlockSpec((b_blk, 1, L), lambda b: (b, 0, 0)),        # additive mask
            pl.BlockSpec((Hh, 3 * Hh), lambda b: (0, 0)),            # wqkv (bf16)
            pl.BlockSpec((1, 3 * Hh), lambda b: (0, 0)),             # bqkv
            pl.BlockSpec((Hh, Hh), lambda b: (0, 0)),                # wo (bf16)
            pl.BlockSpec((1, Hh), lambda b: (0, 0)),                 # bo
            pl.BlockSpec((2, Hh), lambda b: (0, 0)),                 # ln1 gamma/beta
            pl.BlockSpec((Hh, FFN), lambda b: (0, 0)),               # w_ff1 (bf16)
            pl.BlockSpec((1, FFN), lambda b: (0, 0)),                # b_ff1
            pl.BlockSpec((FFN, Hh), lambda b: (0, 0)),               # w_ff2 (bf16)
            pl.BlockSpec((1, Hh), lambda b: (0, 0)),                 # b_ff2
            pl.BlockSpec((2, Hh), lambda b: (0, 0)),                 # ln2 gamma/beta
        ],
        out_specs=pl.BlockSpec((b_blk, L, Hh), lambda b: (b, 0, 0)),
        compiler_params=pltpu.CompilerParams(
            dimension_semantics=("parallel",)),
        cost_estimate=pl.CostEstimate(flops=flops,
                                      transcendentals=transcendentals,
                                      bytes_accessed=bytes_accessed),
    )(x, mask_add, lp["wqkv"], lp["bqkv"], lp["wo"], lp["bo"], lp["ln1"],
      lp["w_ff1"], lp["b_ff1"], lp["w_ff2"], lp["b_ff2"], lp["ln2"])


# ----------------- fused pooling + pre_classifier + classifier ----------------
def _head_kernel(h_ref, mask_ref, pw_ref, pb_ref, pre_w_ref, pre_b_ref,
                 cls_w_ref, cls_b_ref, o_ref, *, batch, seq_len):
    """AttentionPooling + pre_classifier + ReLU + (dropout=id) + classifier, all B at once."""
    h = h_ref[...]                                  # (B, L, H) bf16
    mask = mask_ref[...]                            # (B, L, 1) float 0/1
    Hh = h.shape[-1]
    hf = h.reshape(batch * seq_len, Hh)             # (B*L, H) bf16

    # per-token scalar score via one (B*L,H)x(H,1) matmul, masked softmax over L
    scores = jnp.dot(hf, pw_ref[...],
                     preferred_element_type=jnp.float32) + pb_ref[...]  # (B*L, 1)
    scores = scores.reshape(batch, seq_len, 1)
    scores = jnp.where(mask > 0.0, scores, jnp.float32(-1e9))
    m = jnp.max(scores, axis=1, keepdims=True)
    p = jnp.exp(scores - m)
    p = p / jnp.sum(p, axis=1, keepdims=True)       # exact division (sensitive softmax)

    # pooled[b, :] = sum_l p[b, l] * h[b, l, :]  -> (B, H)
    pooled = jnp.sum(p * h.astype(jnp.float32), axis=1)

    # pre_classifier + ReLU   (Dropout(0.3) is identity at inference)
    pre = jnp.dot(pooled.astype(jnp.bfloat16), pre_w_ref[...],
                  preferred_element_type=jnp.float32) + pre_b_ref[...]  # (B, H)
    pre = jnp.maximum(pre, 0.0)
    # classifier
    out = jnp.dot(pre.astype(jnp.bfloat16), cls_w_ref[...],
                  preferred_element_type=jnp.float32) + cls_b_ref[...]  # (B, C)
    o_ref[...] = out


def classification_head(hidden, mask_col, params):
    """hidden: (B, L, H) bf16, mask_col: (B, L, 1) float 0/1 -> (B, C) f32."""
    B, L, Hh = hidden.shape
    C = params["cls_w"].shape[1]
    kernel = functools.partial(_head_kernel, batch=B, seq_len=L)
    return pl.pallas_call(
        kernel,
        out_shape=jax.ShapeDtypeStruct((B, C), jnp.float32),
        grid=(1,),
        in_specs=[
            pl.BlockSpec((B, L, Hh), lambda b: (0, 0, 0)),   # hidden (bf16)
            pl.BlockSpec((B, L, 1), lambda b: (0, 0, 0)),    # mask
            pl.BlockSpec((Hh, 1), lambda b: (0, 0)),         # pool_w (bf16)
            pl.BlockSpec((1, 1), lambda b: (0, 0)),          # pool_b
            pl.BlockSpec((Hh, Hh), lambda b: (0, 0)),        # pre_w (bf16)
            pl.BlockSpec((1, Hh), lambda b: (0, 0)),         # pre_b
            pl.BlockSpec((Hh, C), lambda b: (0, 0)),         # cls_w (bf16)
            pl.BlockSpec((1, C), lambda b: (0, 0)),          # cls_b
        ],
        out_specs=pl.BlockSpec((B, C), lambda b: (0, 0)),
        compiler_params=pltpu.CompilerParams(
            dimension_semantics=("arbitrary",)),
    )(hidden, mask_col, params["pool_w"], params["pool_b"],
      params["pre_w"], params["pre_b"], params["cls_w"], params["cls_b"])


# --------------------------------- JAX glue -----------------------------------
def layer_norm(x, gamma, beta):
    mu = jnp.mean(x, axis=-1, keepdims=True)
    var = jnp.mean((x - mu) ** 2, axis=-1, keepdims=True)
    return (x - mu) / jnp.sqrt(var + EPS) * gamma + beta


def forward(params, input_ids, attention_mask):
    """inputs = {'input_ids': (B,L) int32, 'attention_mask': (B,L) int32} -> (B, 6)."""
    B, L = input_ids.shape
    # DistilBERT embeddings: word + position, then LayerNorm (JAX glue)
    x = params["word_emb"][input_ids] + params["pos_emb"][jnp.arange(L)][None]
    x = layer_norm(x, params["emb_ln_g"], params["emb_ln_b"])
    x = x.astype(jnp.bfloat16)                            # bf16 activations between blocks

    mask_f = attention_mask.astype(jnp.float32)
    mask_add = ((1.0 - mask_f) * -1e9).reshape(B, 1, L)   # additive key mask, once

    for lp in params["layers"]:
        x = transformer_block(x, mask_add, lp)

    # pool -> pre_classifier -> ReLU -> dropout(id) -> classifier, fused in Pallas
    return classification_head(x, mask_f.reshape(B, L, 1), params)


def init_params(key):
    # TODO(synk): synthetic deterministic weights; real checkpoint not loaded.
    keys = iter(jax.random.split(key, 8 + 8 * N_LAYERS))
    scale_q = 1.0 / (D_HEAD ** 0.5)

    def randf(shape):
        return jax.random.normal(next(keys), shape, jnp.float32) * 0.02

    def ln_pack():
        return jnp.stack([jnp.ones((H,), jnp.float32),
                          jnp.zeros((H,), jnp.float32)])          # (2, H)

    params = {
        "word_emb": randf((VOCAB, H)),
        "pos_emb": randf((MAX_POS, H)),
        "emb_ln_g": jnp.ones((H,), jnp.float32),
        "emb_ln_b": jnp.zeros((H,), jnp.float32),
        "layers": [],
        # AttentionPooling(768): linear score -> masked softmax -> weighted sum
        "pool_w": randf((H, 1)).astype(jnp.bfloat16),             # (H, 1) bf16
        "pool_b": jnp.zeros((1, 1), jnp.float32),
        # pre_classifier Linear(768, 768)
        "pre_w": randf((H, H)).astype(jnp.bfloat16),
        "pre_b": jnp.zeros((1, H), jnp.float32),
        # classifier Linear(768, 6)
        "cls_w": randf((H, N_CLASSES)).astype(jnp.bfloat16),
        "cls_b": jnp.zeros((1, N_CLASSES), jnp.float32),
    }
    for _ in range(N_LAYERS):
        wqkv = randf((H, 3 * H))
        bqkv = jnp.zeros((1, 3 * H), jnp.float32)
        # fold the 1/sqrt(d_head) attention scale into the Q columns / Q bias
        wqkv = wqkv.at[:, :H].multiply(scale_q)
        bqkv = bqkv.at[:, :H].multiply(scale_q)
        params["layers"].append({
            "wqkv": wqkv.astype(jnp.bfloat16),                    # fused Q|K|V
            "bqkv": bqkv,
            "wo": randf((H, H)).astype(jnp.bfloat16),
            "bo": jnp.zeros((1, H), jnp.float32),
            "ln1": ln_pack(),
            "w_ff1": randf((H, FFN)).astype(jnp.bfloat16),
            "b_ff1": jnp.zeros((1, FFN), jnp.float32),
            "w_ff2": randf((FFN, H)).astype(jnp.bfloat16),
            "b_ff2": jnp.zeros((1, H), jnp.float32),
            "ln2": ln_pack(),
        })
    return params


if __name__ == "__main__":
    B, L = 2, 8
    params = init_params(jax.random.PRNGKey(0))
    kid = jax.random.fold_in(jax.random.PRNGKey(0), 1)
    input_ids = jax.random.randint(kid, (B, L), 0, VOCAB, dtype=jnp.int32)
    attention_mask = jnp.ones((B, L), dtype=jnp.int32).at[1, 5:].set(0)  # pad tail

    out = jax.jit(forward)(params, input_ids, attention_mask)
    out = jax.block_until_ready(out)
    assert out.shape == (B, N_CLASSES) and out.dtype == jnp.float32
    assert bool(jnp.all(jnp.isfinite(out)))
    print("KERNEL_OK")
</pallas_src>

<mosaic_0001>
module attributes {stable_mosaic.version = 11 : i64} {
  func.func @_block_kernel(%arg0: i32, %arg1: memref<2x8x64xbf16, #tpu.memory_space<vmem>>, %arg2: memref<2x1x8xf32, #tpu.memory_space<vmem>>, %arg3: memref<64x192xbf16, #tpu.memory_space<vmem>>, %arg4: memref<1x192xf32, #tpu.memory_space<vmem>>, %arg5: memref<64x64xbf16, #tpu.memory_space<vmem>>, %arg6: memref<1x64xf32, #tpu.memory_space<vmem>>, %arg7: memref<2x64xf32, #tpu.memory_space<vmem>>, %arg8: memref<64x128xbf16, #tpu.memory_space<vmem>>, %arg9: memref<1x128xf32, #tpu.memory_space<vmem>>, %arg10: memref<128x64xbf16, #tpu.memory_space<vmem>>, %arg11: memref<1x64xf32, #tpu.memory_space<vmem>>, %arg12: memref<2x64xf32, #tpu.memory_space<vmem>>, %arg13: memref<2x8x64xbf16, #tpu.memory_space<vmem>>) attributes {dimension_semantics = [#tpu.dimension_semantics<parallel>], iteration_bounds = array<i64: 1>, scalar_prefetch = 0 : i64, scratch_operands = 0 : i64, tpu.core_type = #tpu.core_type<tc>, window_params = [{transform_indices = @transform_0, window_bounds = array<i64: 2, 8, 64>}, {transform_indices = @transform_1, window_bounds = array<i64: 2, 1, 8>}, {pipeline_mode = #tpu.pipeline_mode<synchronous>, transform_indices = @transform_2, window_bounds = array<i64: 64, 192>}, {pipeline_mode = #tpu.pipeline_mode<synchronous>, transform_indices = @transform_3, window_bounds = array<i64: 1, 192>}, {pipeline_mode = #tpu.pipeline_mode<synchronous>, transform_indices = @transform_4, window_bounds = array<i64: 64, 64>}, {pipeline_mode = #tpu.pipeline_mode<synchronous>, transform_indices = @transform_5, window_bounds = array<i64: 1, 64>}, {pipeline_mode = #tpu.pipeline_mode<synchronous>, transform_indices = @transform_6, window_bounds = array<i64: 2, 64>}, {pipeline_mode = #tpu.pipeline_mode<synchronous>, transform_indices = @transform_7, window_bounds = array<i64: 64, 128>}, {pipeline_mode = #tpu.pipeline_mode<synchronous>, transform_indices = @transform_8, window_bounds = array<i64: 1, 128>}, {pipeline_mode = #tpu.pipeline_mode<synchronous>, transform_indices = @transform_9, window_bounds = array<i64: 128, 64>}, {pipeline_mode = #tpu.pipeline_mode<synchronous>, transform_indices = @transform_10, window_bounds = array<i64: 1, 64>}, {pipeline_mode = #tpu.pipeline_mode<synchronous>, transform_indices = @transform_11, window_bounds = array<i64: 2, 64>}, {transform_indices = @transform_12, window_bounds = array<i64: 2, 8, 64>}]} {
    %c0 = arith.constant 0 : index
    %c0_0 = arith.constant 0 : index
    %c0_1 = arith.constant 0 : index
    %0 = vector.load %arg1[%c0, %c0_0, %c0_1] : memref<2x8x64xbf16, #tpu.memory_space<vmem>>, vector<2x8x64xbf16>
    %1 = vector.shape_cast %0 : vector<2x8x64xbf16> to vector<16x64xbf16>
    %c0_2 = arith.constant 0 : index
    %c0_3 = arith.constant 0 : index
    %c0_4 = arith.constant 0 : index
    %2 = vector.load %arg2[%c0_2, %c0_3, %c0_4] : memref<2x1x8xf32, #tpu.memory_space<vmem>>, vector<2x1x8xf32>
    %c0_5 = arith.constant 0 : index
    %c0_6 = arith.constant 0 : index
    %3 = vector.load %arg3[%c0_5, %c0_6] : memref<64x192xbf16, #tpu.memory_space<vmem>>, vector<64x192xbf16>
    %cst = arith.constant dense<0.000000e+00> : vector<16x192xf32>
    %4 = tpu.matmul %1, %3, %cst {dimension_numbers = #tpu.dot_dimension_numbers<[1], [0], [0], [1], [0, 0, 1, 1], [], []>} : vector<16x64xbf16>, vector<64x192xbf16>, vector<16x192xf32> -> vector<16x192xf32>
    %c0_7 = arith.constant 0 : index
    %c0_8 = arith.constant 0 : index
    %5 = vector.load %arg4[%c0_7, %c0_8] : memref<1x192xf32, #tpu.memory_space<vmem>>, vector<1x192xf32>
    %6 = vector.broadcast %5 : vector<1x192xf32> to vector<16x192xf32>
    %7 = arith.addf %4, %6 : vector<16x192xf32>
    %8 = vector.extract_strided_slice %7 {offsets = [0, 0], sizes = [16, 16], strides = [1, 1]} : vector<16x192xf32> to vector<16x16xf32>
    %9 = vector.shape_cast %8 : vector<16x16xf32> to vector<2x8x16xf32>
    %10 = arith.truncf %9 : vector<2x8x16xf32> to vector<2x8x16xbf16>
    %11 = vector.extract_strided_slice %7 {offsets = [0, 64], sizes = [16, 16], strides = [1, 1]} : vector<16x192xf32> to vector<16x16xf32>
    %12 = vector.shape_cast %11 : vector<16x16xf32> to vector<2x8x16xf32>
    %13 = arith.truncf %12 : vector<2x8x16xf32> to vector<2x8x16xbf16>
    %14 = vector.extract_strided_slice %7 {offsets = [0, 128], sizes = [16, 16], strides = [1, 1]} : vector<16x192xf32> to vector<16x16xf32>
    %15 = vector.shape_cast %14 : vector<16x16xf32> to vector<2x8x16xf32>
    %16 = arith.truncf %15 : vector<2x8x16xf32> to vector<2x8x16xbf16>
    "tpu.trace_start"() <{level = 10 : i32, message = "bld,bmd->blm"}> : () -> ()
    %cst_9 = arith.constant dense<0.000000e+00> : vector<2x8x8xf32>
    %17 = tpu.matmul %10, %13, %cst_9 {dimension_numbers = #tpu.dot_dimension_numbers<[2], [2], [1], [1], [0, 0, 0, 1, 1, 1], [0], [0]>} : vector<2x8x16xbf16>, vector<2x8x16xbf16>, vector<2x8x8xf32> -> vector<2x8x8xf32>
    "tpu.trace_stop"() : () -> ()
    %18 = vector.broadcast %2 : vector<2x1x8xf32> to vector<2x8x8xf32>
    %19 = arith.addf %17, %18 : vector<2x8x8xf32>
    %cst_10 = arith.constant dense<0xFF800000> : vector<2x8xf32>
    %20 = vector.multi_reduction <maximumf>, %19, %cst_10 [2] : vector<2x8x8xf32> to vector<2x8xf32>
    %21 = vector.shape_cast %20 : vector<2x8xf32> to vector<2x8x1xf32>
    %22 = vector.broadcast %21 : vector<2x8x1xf32> to vector<2x8x8xf32>
    %23 = arith.subf %19, %22 : vector<2x8x8xf32>
    %24 = math.exp %23 : vector<2x8x8xf32>
    %cst_11 = arith.constant dense<0.000000e+00> : vector<2x8xf32>
    %25 = vector.multi_reduction <add>, %24, %cst_11 [2] : vector<2x8x8xf32> to vector<2x8xf32>
    %26 = vector.shape_cast %25 : vector<2x8xf32> to vector<2x8x1xf32>
    %27 = tpu.reciprocal %26 {approx = true} : vector<2x8x1xf32> -> vector<2x8x1xf32>
    %28 = vector.broadcast %27 : vector<2x8x1xf32> to vector<2x8x8xf32>
    %29 = arith.mulf %24, %28 : vector<2x8x8xf32>
    %30 = arith.truncf %29 : vector<2x8x8xf32> to vector<2x8x8xbf16>
    "tpu.trace_start"() <{level = 10 : i32, message = "blm,bmd->bld"}> : () -> ()
    %cst_12 = arith.constant dense<0.000000e+00> : vector<2x8x16xf32>
    %31 = tpu.matmul %30, %16, %cst_12 {dimension_numbers = #tpu.dot_dimension_numbers<[2], [1], [1], [2], [0, 0, 0, 1, 1, 2], [0], [0]>} : vector<2x8x8xbf16>, vector<2x8x16xbf16>, vector<2x8x16xf32> -> vector<2x8x16xf32>
    "tpu.trace_stop"() : () -> ()
    %32 = vector.shape_cast %31 : vector<2x8x16xf32> to vector<16x16xf32>
    %33 = vector.extract_strided_slice %7 {offsets = [0, 16], sizes = [16, 16], strides = [1, 1]} : vector<16x192xf32> to vector<16x16xf32>
    %34 = vector.shape_cast %33 : vector<16x16xf32> to vector<2x8x16xf32>
    %35 = arith.truncf %34 : vector<2x8x16xf32> to vector<2x8x16xbf16>
    %36 = vector.extract_strided_slice %7 {offsets = [0, 80], sizes = [16, 16], strides = [1, 1]} : vector<16x192xf32> to vector<16x16xf32>
    %37 = vector.shape_cast %36 : vector<16x16xf32> to vector<2x8x16xf32>
    %38 = arith.truncf %37 : vector<2x8x16xf32> to vector<2x8x16xbf16>
    %39 = vector.extract_strided_slice %7 {offsets = [0, 144], sizes = [16, 16], strides = [1, 1]} : vector<16x192xf32> to vector<16x16xf32>
    %40 = vector.shape_cast %39 : vector<16x16xf32> to vector<2x8x16xf32>
    %41 = arith.truncf %40 : vector<2x8x16xf32> to vector<2x8x16xbf16>
    "tpu.trace_start"() <{level = 10 : i32, message = "bld,bmd->blm"}> : () -> ()
    %cst_13 = arith.constant dense<0.000000e+00> : vector<2x8x8xf32>
    %42 = tpu.matmul %35, %38, %cst_13 {dimension_numbers = #tpu.dot_dimension_numbers<[2], [2], [1], [1], [0, 0, 0, 1, 1, 1], [0], [0]>} : vector<2x8x16xbf16>, vector<2x8x16xbf16>, vector<2x8x8xf32> -> vector<2x8x8xf32>
    "tpu.trace_stop"() : () -> ()
    %43 = vector.broadcast %2 : vector<2x1x8xf32> to vector<2x8x8xf32>
    %44 = arith.addf %42, %43 : vector<2x8x8xf32>
    %cst_14 = arith.constant dense<0xFF800000> : vector<2x8xf32>
    %45 = vector.multi_reduction <maximumf>, %44, %cst_14 [2] : vector<2x8x8xf32> to vector<2x8xf32>
    %46 = vector.shape_cast %45 : vector<2x8xf32> to vector<2x8x1xf32>
    %47 = vector.broadcast %46 : vector<2x8x1xf32> to vector<2x8x8xf32>
    %48 = arith.subf %44, %47 : vector<2x8x8xf32>
    %49 = math.exp %48 : vector<2x8x8xf32>
    %cst_15 = arith.constant dense<0.000000e+00> : vector<2x8xf32>
    %50 = vector.multi_reduction <add>, %49, %cst_15 [2] : vector<2x8x8xf32> to vector<2x8xf32>
    %51 = vector.shape_cast %50 : vector<2x8xf32> to vector<2x8x1xf32>
    %52 = tpu.reciprocal %51 {approx = true} : vector<2x8x1xf32> -> vector<2x8x1xf32>
    %53 = vector.broadcast %52 : vector<2x8x1xf32> to vector<2x8x8xf32>
    %54 = arith.mulf %49, %53 : vector<2x8x8xf32>
    %55 = arith.truncf %54 : vector<2x8x8xf32> to vector<2x8x8xbf16>
    "tpu.trace_start"() <{level = 10 : i32, message = "blm,bmd->bld"}> : () -> ()
    %cst_16 = arith.constant dense<0.000000e+00> : vector<2x8x16xf32>
    %56 = tpu.matmul %55, %41, %cst_16 {dimension_numbers = #tpu.dot_dimension_numbers<[2], [1], [1], [2], [0, 0, 0, 1, 1, 2], [0], [0]>} : vector<2x8x8xbf16>, vector<2x8x16xbf16>, vector<2x8x16xf32> -> vector<2x8x16xf32>
    "tpu.trace_stop"() : () -> ()
    %57 = vector.shape_cast %56 : vector<2x8x16xf32> to vector<16x16xf32>
    %58 = vector.extract_strided_slice %7 {offsets = [0, 32], sizes = [16, 16], strides = [1, 1]} : vector<16x192xf32> to vector<16x16xf32>
    %59 = vector.shape_cast %58 : vector<16x16xf32> to vector<2x8x16xf32>
    %60 = arith.truncf %59 : vector<2x8x16xf32> to vector<2x8x16xbf16>
    %61 = vector.extract_strided_slice %7 {offsets = [0, 96], sizes = [16, 16], strides = [1, 1]} : vector<16x192xf32> to vector<16x16xf32>
    %62 = vector.shape_cast %61 : vector<16x16xf32> to vector<2x8x16xf32>
    %63 = arith.truncf %62 : vector<2x8x16xf32> to vector<2x8x16xbf16>
    %64 = vector.extract_strided_slice %7 {offsets = [0, 160], sizes = [16, 16], strides = [1, 1]} : vector<16x192xf32> to vector<16x16xf32>
    %65 = vector.shape_cast %64 : vector<16x16xf32> to vector<2x8x16xf32>
    %66 = arith.truncf %65 : vector<2x8x16xf32> to vector<2x8x16xbf16>
    "tpu.trace_start"() <{level = 10 : i32, message = "bld,bmd->blm"}> : () -> ()
    %cst_17 = arith.constant dense<0.000000e+00> : vector<2x8x8xf32>
    %67 = tpu.matmul %60, %63, %cst_17 {dimension_numbers = #tpu.dot_dimension_numbers<[2], [2], [1], [1], [0, 0, 0, 1, 1, 1], [0], [0]>} : vector<2x8x16xbf16>, vector<2x8x16xbf16>, vector<2x8x8xf32> -> vector<2x8x8xf32>
    "tpu.trace_stop"() : () -> ()
    %68 = vector.broadcast %2 : vector<2x1x8xf32> to vector<2x8x8xf32>
    %69 = arith.addf %67, %68 : vector<2x8x8xf32>
    %cst_18 = arith.constant dense<0xFF800000> : vector<2x8xf32>
    %70 = vector.multi_reduction <maximumf>, %69, %cst_18 [2] : vector<2x8x8xf32> to vector<2x8xf32>
    %71 = vector.shape_cast %70 : vector<2x8xf32> to vector<2x8x1xf32>
    %72 = vector.broadcast %71 : vector<2x8x1xf32> to vector<2x8x8xf32>
    %73 = arith.subf %69, %72 : vector<2x8x8xf32>
    %74 = math.exp %73 : vector<2x8x8xf32>
    %cst_19 = arith.constant dense<0.000000e+00> : vector<2x8xf32>
    %75 = vector.multi_reduction <add>, %74, %cst_19 [2] : vector<2x8x8xf32> to vector<2x8xf32>
    %76 = vector.shape_cast %75 : vector<2x8xf32> to vector<2x8x1xf32>
    %77 = tpu.reciprocal %76 {approx = true} : vector<2x8x1xf32> -> vector<2x8x1xf32>
    %78 = vector.broadcast %77 : vector<2x8x1xf32> to vector<2x8x8xf32>
    %79 = arith.mulf %74, %78 : vector<2x8x8xf32>
    %80 = arith.truncf %79 : vector<2x8x8xf32> to vector<2x8x8xbf16>
    "tpu.trace_start"() <{level = 10 : i32, message = "blm,bmd->bld"}> : () -> ()
    %cst_20 = arith.constant dense<0.000000e+00> : vector<2x8x16xf32>
    %81 = tpu.matmul %80, %66, %cst_20 {dimension_numbers = #tpu.dot_dimension_numbers<[2], [1], [1], [2], [0, 0, 0, 1, 1, 2], [0], [0]>} : vector<2x8x8xbf16>, vector<2x8x16xbf16>, vector<2x8x16xf32> -> vector<2x8x16xf32>
    "tpu.trace_stop"() : () -> ()
    %82 = vector.shape_cast %81 : vector<2x8x16xf32> to vector<16x16xf32>
    %83 = vector.extract_strided_slice %7 {offsets = [0, 48], sizes = [16, 16], strides = [1, 1]} : vector<16x192xf32> to vector<16x16xf32>
    %84 = vector.shape_cast %83 : vector<16x16xf32> to vector<2x8x16xf32>
    %85 = arith.truncf %84 : vector<2x8x16xf32> to vector<2x8x16xbf16>
    %86 = vector.extract_strided_slice %7 {offsets = [0, 112], sizes = [16, 16], strides = [1, 1]} : vector<16x192xf32> to vector<16x16xf32>
    %87 = vector.shape_cast %86 : vector<16x16xf32> to vector<2x8x16xf32>
    %88 = arith.truncf %87 : vector<2x8x16xf32> to vector<2x8x16xbf16>
    %89 = vector.extract_strided_slice %7 {offsets = [0, 176], sizes = [16, 16], strides = [1, 1]} : vector<16x192xf32> to vector<16x16xf32>
    %90 = vector.shape_cast %89 : vector<16x16xf32> to vector<2x8x16xf32>
    %91 = arith.truncf %90 : vector<2x8x16xf32> to vector<2x8x16xbf16>
    "tpu.trace_start"() <{level = 10 : i32, message = "bld,bmd->blm"}> : () -> ()
    %cst_21 = arith.constant dense<0.000000e+00> : vector<2x8x8xf32>
    %92 = tpu.matmul %85, %88, %cst_21 {dimension_numbers = #tpu.dot_dimension_numbers<[2], [2], [1], [1], [0, 0, 0, 1, 1, 1], [0], [0]>} : vector<2x8x16xbf16>, vector<2x8x16xbf16>, vector<2x8x8xf32> -> vector<2x8x8xf32>
    "tpu.trace_stop"() : () -> ()
    %93 = vector.broadcast %2 : vector<2x1x8xf32> to vector<2x8x8xf32>
    %94 = arith.addf %92, %93 : vector<2x8x8xf32>
    %cst_22 = arith.constant dense<0xFF800000> : vector<2x8xf32>
    %95 = vector.multi_reduction <maximumf>, %94, %cst_22 [2] : vector<2x8x8xf32> to vector<2x8xf32>
    %96 = vector.shape_cast %95 : vector<2x8xf32> to vector<2x8x1xf32>
    %97 = vector.broadcast %96 : vector<2x8x1xf32> to vector<2x8x8xf32>
    %98 = arith.subf %94, %97 : vector<2x8x8xf32>
    %99 = math.exp %98 : vector<2x8x8xf32>
    %cst_23 = arith.constant dense<0.000000e+00> : vector<2x8xf32>
    %100 = vector.multi_reduction <add>, %99, %cst_23 [2] : vector<2x8x8xf32> to vector<2x8xf32>
    %101 = vector.shape_cast %100 : vector<2x8xf32> to vector<2x8x1xf32>
    %102 = tpu.reciprocal %101 {approx = true} : vector<2x8x1xf32> -> vector<2x8x1xf32>
    %103 = vector.broadcast %102 : vector<2x8x1xf32> to vector<2x8x8xf32>
    %104 = arith.mulf %99, %103 : vector<2x8x8xf32>
    %105 = arith.truncf %104 : vector<2x8x8xf32> to vector<2x8x8xbf16>
    "tpu.trace_start"() <{level = 10 : i32, message = "blm,bmd->bld"}> : () -> ()
    %cst_24 = arith.constant dense<0.000000e+00> : vector<2x8x16xf32>
    %106 = tpu.matmul %105, %91, %cst_24 {dimension_numbers = #tpu.dot_dimension_numbers<[2], [1], [1], [2], [0, 0, 0, 1, 1, 2], [0], [0]>} : vector<2x8x8xbf16>, vector<2x8x16xbf16>, vector<2x8x16xf32> -> vector<2x8x16xf32>
    "tpu.trace_stop"() : () -> ()
    %107 = vector.shape_cast %106 : vector<2x8x16xf32> to vector<16x16xf32>
    %108 = tpu.concatenate %32, %57, %82, %107 in 1 : vector<16x16xf32>, vector<16x16xf32>, vector<16x16xf32>, vector<16x16xf32> -> vector<16x64xf32>
    %109 = arith.truncf %108 : vector<16x64xf32> to vector<16x64xbf16>
    %c0_25 = arith.constant 0 : index
    %c0_26 = arith.constant 0 : index
    %110 = vector.load %arg5[%c0_25, %c0_26] : memref<64x64xbf16, #tpu.memory_space<vmem>>, vector<64x64xbf16>
    %cst_27 = arith.constant dense<0.000000e+00> : vector<16x64xf32>
    %111 = tpu.matmul %109, %110, %cst_27 {dimension_numbers = #tpu.dot_dimension_numbers<[1], [0], [0], [1], [0, 0, 1, 1], [], []>} : vector<16x64xbf16>, vector<64x64xbf16>, vector<16x64xf32> -> vector<16x64xf32>
    %c0_28 = arith.constant 0 : index
    %c0_29 = arith.constant 0 : index
    %112 = vector.load %arg6[%c0_28, %c0_29] : memref<1x64xf32, #tpu.memory_space<vmem>>, vector<1x64xf32>
    %113 = vector.broadcast %112 : vector<1x64xf32> to vector<16x64xf32>
    %114 = arith.addf %111, %113 : vector<16x64xf32>
    %115 = arith.extf %1 : vector<16x64xbf16> to vector<16x64xf32>
    %116 = arith.addf %115, %114 : vector<16x64xf32>
    %c0_30 = arith.constant 0 : index
    %c0_31 = arith.constant 0 : index
    %117 = vector.load %arg7[%c0_30, %c0_31] : memref<2x64xf32, #tpu.memory_space<vmem>>, vector<1x64xf32>
    %c1 = arith.constant 1 : index
    %c0_32 = arith.constant 0 : index
    %118 = vector.load %arg7[%c1, %c0_32] : memref<2x64xf32, #tpu.memory_space<vmem>>, vector<1x64xf32>
    %cst_33 = arith.constant dense<0.000000e+00> : vector<16xf32>
    %119 = vector.multi_reduction <add>, %116, %cst_33 [1] : vector<16x64xf32> to vector<16xf32>
    %120 = vector.shape_cast %119 : vector<16xf32> to vector<16x1xf32>
    %cst_34 = arith.constant 6.400000e+01 : f32
    %121 = vector.broadcast %cst_34 : f32 to vector<16x1xf32>
    %122 = arith.divf %120, %121 : vector<16x1xf32>
    %123 = vector.broadcast %122 : vector<16x1xf32> to vector<16x64xf32>
    %124 = arith.subf %116, %123 : vector<16x64xf32>
    %125 = arith.mulf %124, %124 : vector<16x64xf32>
    %cst_35 = arith.constant dense<0.000000e+00> : vector<16xf32>
    %126 = vector.multi_reduction <add>, %125, %cst_35 [1] : vector<16x64xf32> to vector<16xf32>
    %127 = vector.shape_cast %126 : vector<16xf32> to vector<16x1xf32>
    %cst_36 = arith.constant 6.400000e+01 : f32
    %128 = vector.broadcast %cst_36 : f32 to vector<16x1xf32>
    %129 = arith.divf %127, %128 : vector<16x1xf32>
    %130 = vector.broadcast %122 : vector<16x1xf32> to vector<16x64xf32>
    %131 = arith.subf %116, %130 : vector<16x64xf32>
    %cst_37 = arith.constant 9.99999996E-13 : f32
    %132 = vector.broadcast %cst_37 : f32 to vector<16x1xf32>
    %133 = arith.addf %129, %132 : vector<16x1xf32>
    %134 = math.rsqrt %133 : vector<16x1xf32>
    %135 = vector.broadcast %134 : vector<16x1xf32> to vector<16x64xf32>
    %136 = arith.mulf %131, %135 : vector<16x64xf32>
    %137 = vector.broadcast %117 : vector<1x64xf32> to vector<16x64xf32>
    %138 = arith.mulf %136, %137 : vector<16x64xf32>
    %139 = vector.broadcast %118 : vector<1x64xf32> to vector<16x64xf32>
    %140 = arith.addf %138, %139 : vector<16x64xf32>
    %141 = arith.truncf %140 : vector<16x64xf32> to vector<16x64xbf16>
    %c0_38 = arith.constant 0 : index
    %c0_39 = arith.constant 0 : index
    %142 = vector.load %arg8[%c0_38, %c0_39] : memref<64x128xbf16, #tpu.memory_space<vmem>>, vector<64x128xbf16>
    %cst_40 = arith.constant dense<0.000000e+00> : vector<16x128xf32>
    %143 = tpu.matmul %141, %142, %cst_40 {dimension_numbers = #tpu.dot_dimension_numbers<[1], [0], [0], [1], [0, 0, 1, 1], [], []>} : vector<16x64xbf16>, vector<64x128xbf16>, vector<16x128xf32> -> vector<16x128xf32>
    %c0_41 = arith.constant 0 : index
    %c0_42 = arith.constant 0 : index
    %144 = vector.load %arg9[%c0_41, %c0_42] : memref<1x128xf32, #tpu.memory_space<vmem>>, vector<1x128xf32>
    %145 = vector.broadcast %144 : vector<1x128xf32> to vector<16x128xf32>
    %146 = arith.addf %143, %145 : vector<16x128xf32>
    %147 = arith.mulf %146, %146 : vector<16x128xf32>
    %148 = arith.mulf %146, %147 : vector<16x128xf32>
    %cst_43 = arith.constant 4.471500e-02 : f32
    %149 = vector.broadcast %cst_43 : f32 to vector<16x128xf32>
    %150 = arith.mulf %149, %148 : vector<16x128xf32>
    %151 = arith.addf %146, %150 : vector<16x128xf32>
    %cst_44 = arith.constant 0.797884583 : f32
    %152 = vector.broadcast %cst_44 : f32 to vector<16x128xf32>
    %153 = arith.mulf %152, %151 : vector<16x128xf32>
    %154 = math.tanh %153 : vector<16x128xf32>
    %cst_45 = arith.constant 1.000000e+00 : f32
    %155 = vector.broadcast %cst_45 : f32 to vector<16x128xf32>
    %156 = arith.addf %155, %154 : vector<16x128xf32>
    %cst_46 = arith.constant 5.000000e-01 : f32
    %157 = vector.broadcast %cst_46 : f32 to vector<16x128xf32>
    %158 = arith.mulf %157, %156 : vector<16x128xf32>
    %159 = arith.mulf %146, %158 : vector<16x128xf32>
    %160 = arith.truncf %159 : vector<16x128xf32> to vector<16x128xbf16>
    %c0_47 = arith.constant 0 : index
    %c0_48 = arith.constant 0 : index
    %161 = vector.load %arg10[%c0_47, %c0_48] : memref<128x64xbf16, #tpu.memory_space<vmem>>, vector<128x64xbf16>
    %cst_49 = arith.constant dense<0.000000e+00> : vector<16x64xf32>
    %162 = tpu.matmul %160, %161, %cst_49 {dimension_numbers = #tpu.dot_dimension_numbers<[1], [0], [0], [1], [0, 0, 1, 1], [], []>} : vector<16x128xbf16>, vector<128x64xbf16>, vector<16x64xf32> -> vector<16x64xf32>
    %c0_50 = arith.constant 0 : index
    %c0_51 = arith.constant 0 : index
    %163 = vector.load %arg11[%c0_50, %c0_51] : memref<1x64xf32, #tpu.memory_space<vmem>>, vector<1x64xf32>
    %164 = vector.broadcast %163 : vector<1x64xf32> to vector<16x64xf32>
    %165 = arith.addf %162, %164 : vector<16x64xf32>
    %166 = arith.addf %140, %165 : vector<16x64xf32>
    %c0_52 = arith.constant 0 : index
    %c0_53 = arith.constant 0 : index
    %167 = vector.load %arg12[%c0_52, %c0_53] : memref<2x64xf32, #tpu.memory_space<vmem>>, vector<1x64xf32>
    %c1_54 = arith.constant 1 : index
    %c0_55 = arith.constant 0 : index
    %168 = vector.load %arg12[%c1_54, %c0_55] : memref<2x64xf32, #tpu.memory_space<vmem>>, vector<1x64xf32>
    %cst_56 = arith.constant dense<0.000000e+00> : vector<16xf32>
    %169 = vector.multi_reduction <add>, %166, %cst_56 [1] : vector<16x64xf32> to vector<16xf32>
    %170 = vector.shape_cast %169 : vector<16xf32> to vector<16x1xf32>
    %cst_57 = arith.constant 6.400000e+01 : f32
    %171 = vector.broadcast %cst_57 : f32 to vector<16x1xf32>
    %172 = arith.divf %170, %171 : vector<16x1xf32>
    %173 = vector.broadcast %172 : vector<16x1xf32> to vector<16x64xf32>
    %174 = arith.subf %166, %173 : vector<16x64xf32>
    %175 = arith.mulf %174, %174 : vector<16x64xf32>
    %cst_58 = arith.constant dense<0.000000e+00> : vector<16xf32>
    %176 = vector.multi_reduction <add>, %175, %cst_58 [1] : vector<16x64xf32> to vector<16xf32>
    %177 = vector.shape_cast %176 : vector<16xf32> to vector<16x1xf32>
    %cst_59 = arith.constant 6.400000e+01 : f32
    %178 = vector.broadcast %cst_59 : f32 to vector<16x1xf32>
    %179 = arith.divf %177, %178 : vector<16x1xf32>
    %180 = vector.broadcast %172 : vector<16x1xf32> to vector<16x64xf32>
    %181 = arith.subf %166, %180 : vector<16x64xf32>
    %cst_60 = arith.constant 9.99999996E-13 : f32
    %182 = vector.broadcast %cst_60 : f32 to vector<16x1xf32>
    %183 = arith.addf %179, %182 : vector<16x1xf32>
    %184 = math.rsqrt %183 : vector<16x1xf32>
    %185 = vector.broadcast %184 : vector<16x1xf32> to vector<16x64xf32>
    %186 = arith.mulf %181, %185 : vector<16x64xf32>
    %187 = vector.broadcast %167 : vector<1x64xf32> to vector<16x64xf32>
    %188 = arith.mulf %186, %187 : vector<16x64xf32>
    %189 = vector.broadcast %168 : vector<1x64xf32> to vector<16x64xf32>
    %190 = arith.addf %188, %189 : vector<16x64xf32>
    %191 = vector.shape_cast %190 : vector<16x64xf32> to vector<2x8x64xf32>
    %192 = arith.truncf %191 : vector<2x8x64xf32> to vector<2x8x64xbf16>
    %c0_61 = arith.constant 0 : index
    %c0_62 = arith.constant 0 : index
    %c0_63 = arith.constant 0 : index
    %193 = vector.load %arg13[%c0_61, %c0_62, %c0_63] : memref<2x8x64xbf16, #tpu.memory_space<vmem>>, vector<2x8x64xbf16>
    tpu.vector_store %arg13[%c0_61, %c0_62, %c0_63], %192 {strides = array<i32>} : memref<2x8x64xbf16, #tpu.memory_space<vmem>>, vector<2x8x64xbf16>,
    return
  }
  func.func @transform_0(%arg0: i32) -> (i32, i32, i32) {
    %c0_i32 = arith.constant 0 : i32
    %c0_i32_0 = arith.constant 0 : i32
    %c0_i32_1 = arith.constant 0 : i32
    return %arg0, %c0_i32, %c0_i32_0 : i32, i32, i32
  }
  func.func @transform_1(%arg0: i32) -> (i32, i32, i32) {
    %c0_i32 = arith.constant 0 : i32
    %c0_i32_0 = arith.constant 0 : i32
    %c0_i32_1 = arith.constant 0 : i32
    return %arg0, %c0_i32, %c0_i32_0 : i32, i32, i32
  }
  func.func @transform_2(%arg0: i32) -> (i32, i32) {
    %c0_i32 = arith.constant 0 : i32
    %c0_i32_0 = arith.constant 0 : i32
    %c0_i32_1 = arith.constant 0 : i32
    return %c0_i32, %c0_i32_0 : i32, i32
  }
  func.func @transform_3(%arg0: i32) -> (i32, i32) {
    %c0_i32 = arith.constant 0 : i32
    %c0_i32_0 = arith.constant 0 : i32
    %c0_i32_1 = arith.constant 0 : i32
    return %c0_i32, %c0_i32_0 : i32, i32
  }
  func.func @transform_4(%arg0: i32) -> (i32, i32) {
    %c0_i32 = arith.constant 0 : i32
    %c0_i32_0 = arith.constant 0 : i32
    %c0_i32_1 = arith.constant 0 : i32
    return %c0_i32, %c0_i32_0 : i32, i32
  }
  func.func @transform_5(%arg0: i32) -> (i32, i32) {
    %c0_i32 = arith.constant 0 : i32
    %c0_i32_0 = arith.constant 0 : i32
    %c0_i32_1 = arith.constant 0 : i32
    return %c0_i32, %c0_i32_0 : i32, i32
  }
  func.func @transform_6(%arg0: i32) -> (i32, i32) {
    %c0_i32 = arith.constant 0 : i32
    %c0_i32_0 = arith.constant 0 : i32
    %c0_i32_1 = arith.constant 0 : i32
    return %c0_i32, %c0_i32_0 : i32, i32
  }
  func.func @transform_7(%arg0: i32) -> (i32, i32) {
    %c0_i32 = arith.constant 0 : i32
    %c0_i32_0 = arith.constant 0 : i32
    %c0_i32_1 = arith.constant 0 : i32
    return %c0_i32, %c0_i32_0 : i32, i32
  }
  func.func @transform_8(%arg0: i32) -> (i32, i32) {
    %c0_i32 = arith.constant 0 : i32
    %c0_i32_0 = arith.constant 0 : i32
    %c0_i32_1 = arith.constant 0 : i32
    return %c0_i32, %c0_i32_0 : i32, i32
  }
  func.func @transform_9(%arg0: i32) -> (i32, i32) {
    %c0_i32 = arith.constant 0 : i32
    %c0_i32_0 = arith.constant 0 : i32
    %c0_i32_1 = arith.constant 0 : i32
    return %c0_i32, %c0_i32_0 : i32, i32
  }
  func.func @transform_10(%arg0: i32) -> (i32, i32) {
    %c0_i32 = arith.constant 0 : i32
    %c0_i32_0 = arith.constant 0 : i32
    %c0_i32_1 = arith.constant 0 : i32
    return %c0_i32, %c0_i32_0 : i32, i32
  }
  func.func @transform_11(%arg0: i32) -> (i32, i32) {
    %c0_i32 = arith.constant 0 : i32
    %c0_i32_0 = arith.constant 0 : i32
    %c0_i32_1 = arith.constant 0 : i32
    return %c0_i32, %c0_i32_0 : i32, i32
  }
  func.func @transform_12(%arg0: i32) -> (i32, i32, i32) {
    %c0_i32 = arith.constant 0 : i32
    %c0_i32_0 = arith.constant 0 : i32
    %c0_i32_1 = arith.constant 0 : i32
    return %arg0, %c0_i32, %c0_i32_0 : i32, i32, i32
  }
}

module attributes {stable_mosaic.version = 11 : i64} {
  func.func @_head_kernel(%arg0: i32, %arg1: memref<2x8x64xbf16, #tpu.memory_space<vmem>>, %arg2: memref<2x8x1xf32, #tpu.memory_space<vmem>>, %arg3: memref<64x1xbf16, #tpu.memory_space<vmem>>, %arg4: memref<1x1xf32, #tpu.memory_space<vmem>>, %arg5: memref<64x64xbf16, #tpu.memory_space<vmem>>, %arg6: memref<1x64xf32, #tpu.memory_space<vmem>>, %arg7: memref<64x6xbf16, #tpu.memory_space<vmem>>, %arg8: memref<1x6xf32, #tpu.memory_space<vmem>>, %arg9: memref<2x6xf32, #tpu.memory_space<vmem>>) attributes {dimension_semantics = [#tpu.dimension_semantics<arbitrary>], iteration_bounds = array<i64: 1>, scalar_prefetch = 0 : i64, scratch_operands = 0 : i64, tpu.core_type = #tpu.core_type<tc>, window_params = [{pipeline_mode = #tpu.pipeline_mode<synchronous>, transform_indices = @transform_0, window_bounds = array<i64: 2, 8, 64>}, {pipeline_mode = #tpu.pipeline_mode<synchronous>, transform_indices = @transform_1, window_bounds = array<i64: 2, 8, 1>}, {pipeline_mode = #tpu.pipeline_mode<synchronous>, transform_indices = @transform_2, window_bounds = array<i64: 64, 1>}, {pipeline_mode = #tpu.pipeline_mode<synchronous>, transform_indices = @transform_3, window_bounds = array<i64: 1, 1>}, {pipeline_mode = #tpu.pipeline_mode<synchronous>, transform_indices = @transform_4, window_bounds = array<i64: 64, 64>}, {pipeline_mode = #tpu.pipeline_mode<synchronous>, transform_indices = @transform_5, window_bounds = array<i64: 1, 64>}, {pipeline_mode = #tpu.pipeline_mode<synchronous>, transform_indices = @transform_6, window_bounds = array<i64: 64, 6>}, {pipeline_mode = #tpu.pipeline_mode<synchronous>, transform_indices = @transform_7, window_bounds = array<i64: 1, 6>}, {pipeline_mode = #tpu.pipeline_mode<synchronous>, transform_indices = @transform_8, window_bounds = array<i64: 2, 6>}]} {
    %c0 = arith.constant 0 : index
    %c0_0 = arith.constant 0 : index
    %c0_1 = arith.constant 0 : index
    %0 = vector.load %arg1[%c0, %c0_0, %c0_1] : memref<2x8x64xbf16, #tpu.memory_space<vmem>>, vector<2x8x64xbf16>
    %c0_2 = arith.constant 0 : index
    %c0_3 = arith.constant 0 : index
    %c0_4 = arith.constant 0 : index
    %1 = vector.load %arg2[%c0_2, %c0_3, %c0_4] : memref<2x8x1xf32, #tpu.memory_space<vmem>>, vector<2x8x1xf32>
    %2 = vector.shape_cast %0 : vector<2x8x64xbf16> to vector<16x64xbf16>
    %c0_5 = arith.constant 0 : index
    %c0_6 = arith.constant 0 : index
    %3 = vector.load %arg3[%c0_5, %c0_6] : memref<64x1xbf16, #tpu.memory_space<vmem>>, vector<64x1xbf16>
    %cst = arith.constant dense<0.000000e+00> : vector<16x1xf32>
    %4 = tpu.matmul %2, %3, %cst {dimension_numbers = #tpu.dot_dimension_numbers<[1], [0], [0], [1], [0, 0, 1, 1], [], []>} : vector<16x64xbf16>, vector<64x1xbf16>, vector<16x1xf32> -> vector<16x1xf32>
    %c0_7 = arith.constant 0 : index
    %c0_8 = arith.constant 0 : index
    %5 = vector.load %arg4[%c0_7, %c0_8] : memref<1x1xf32, #tpu.memory_space<vmem>>, vector<1x1xf32>
    %6 = vector.broadcast %5 : vector<1x1xf32> to vector<16x1xf32>
    %7 = arith.addf %4, %6 : vector<16x1xf32>
    %8 = vector.shape_cast %7 : vector<16x1xf32> to vector<2x8x1xf32>
    %cst_9 = arith.constant 0.000000e+00 : f32
    %9 = vector.broadcast %cst_9 : f32 to vector<2x8x1xf32>
    %10 = arith.cmpf ogt, %1, %9 : vector<2x8x1xf32>
    %cst_10 = arith.constant -1.000000e+09 : f32
    %11 = vector.broadcast %cst_10 : f32 to vector<2x8x1xf32>
    %12 = arith.select %10, %8, %11 : vector<2x8x1xi1>, vector<2x8x1xf32>
    %cst_11 = arith.constant dense<0xFF800000> : vector<2x1xf32>
    %13 = vector.multi_reduction <maximumf>, %12, %cst_11 [1] : vector<2x8x1xf32> to vector<2x1xf32>
    %14 = vector.shape_cast %13 : vector<2x1xf32> to vector<2x1x1xf32>
    %15 = vector.broadcast %14 : vector<2x1x1xf32> to vector<2x8x1xf32>
    %16 = arith.subf %12, %15 : vector<2x8x1xf32>
    %17 = math.exp %16 : vector<2x8x1xf32>
    %cst_12 = arith.constant dense<0.000000e+00> : vector<2x1xf32>
    %18 = vector.multi_reduction <add>, %17, %cst_12 [1] : vector<2x8x1xf32> to vector<2x1xf32>
    %19 = vector.shape_cast %18 : vector<2x1xf32> to vector<2x1x1xf32>
    %20 = vector.broadcast %19 : vector<2x1x1xf32> to vector<2x8x1xf32>
    %21 = arith.divf %17, %20 : vector<2x8x1xf32>
    %22 = arith.extf %0 : vector<2x8x64xbf16> to vector<2x8x64xf32>
    %23 = vector.broadcast %21 : vector<2x8x1xf32> to vector<2x8x64xf32>
    %24 = arith.mulf %23, %22 : vector<2x8x64xf32>
    %cst_13 = arith.constant dense<0.000000e+00> : vector<2x64xf32>
    %25 = vector.multi_reduction <add>, %24, %cst_13 [1] : vector<2x8x64xf32> to vector<2x64xf32>
    %26 = arith.truncf %25 : vector<2x64xf32> to vector<2x64xbf16>
    %c0_14 = arith.constant 0 : index
    %c0_15 = arith.constant 0 : index
    %27 = vector.load %arg5[%c0_14, %c0_15] : memref<64x64xbf16, #tpu.memory_space<vmem>>, vector<64x64xbf16>
    %cst_16 = arith.constant dense<0.000000e+00> : vector<2x64xf32>
    %28 = tpu.matmul %26, %27, %cst_16 {dimension_numbers = #tpu.dot_dimension_numbers<[1], [0], [0], [1], [0, 0, 1, 1], [], []>} : vector<2x64xbf16>, vector<64x64xbf16>, vector<2x64xf32> -> vector<2x64xf32>
    %c0_17 = arith.constant 0 : index
    %c0_18 = arith.constant 0 : index
    %29 = vector.load %arg6[%c0_17, %c0_18] : memref<1x64xf32, #tpu.memory_space<vmem>>, vector<1x64xf32>
    %30 = vector.broadcast %29 : vector<1x64xf32> to vector<2x64xf32>
    %31 = arith.addf %28, %30 : vector<2x64xf32>
    %cst_19 = arith.constant 0.000000e+00 : f32
    %32 = vector.broadcast %cst_19 : f32 to vector<2x64xf32>
    %33 = arith.maximumf %31, %32 : vector<2x64xf32>
    %34 = arith.truncf %33 : vector<2x64xf32> to vector<2x64xbf16>
    %c0_20 = arith.constant 0 : index
    %c0_21 = arith.constant 0 : index
    %35 = vector.load %arg7[%c0_20, %c0_21] : memref<64x6xbf16, #tpu.memory_space<vmem>>, vector<64x6xbf16>
    %cst_22 = arith.constant dense<0.000000e+00> : vector<2x6xf32>
    %36 = tpu.matmul %34, %35, %cst_22 {dimension_numbers = #tpu.dot_dimension_numbers<[1], [0], [0], [1], [0, 0, 1, 1], [], []>} : vector<2x64xbf16>, vector<64x6xbf16>, vector<2x6xf32> -> vector<2x6xf32>
    %c0_23 = arith.constant 0 : index
    %c0_24 = arith.constant 0 : index
    %37 = vector.load %arg8[%c0_23, %c0_24] : memref<1x6xf32, #tpu.memory_space<vmem>>, vector<1x6xf32>
    %38 = vector.broadcast %37 : vector<1x6xf32> to vector<2x6xf32>
    %39 = arith.addf %36, %38 : vector<2x6xf32>
    %c0_25 = arith.constant 0 : index
    %c0_26 = arith.constant 0 : index
    %40 = vector.load %arg9[%c0_25, %c0_26] : memref<2x6xf32, #tpu.memory_space<vmem>>, vector<2x6xf32>
    tpu.vector_store %arg9[%c0_25, %c0_26], %39 {strides = array<i32>} : memref<2x6xf32, #tpu.memory_space<vmem>>, vector<2x6xf32>,
    return
  }
  func.func @transform_0(%arg0: i32) -> (i32, i32, i32) {
    %c0_i32 = arith.constant 0 : i32
    %c0_i32_0 = arith.constant 0 : i32
    %c0_i32_1 = arith.constant 0 : i32
    %c0_i32_2 = arith.constant 0 : i32
    return %c0_i32, %c0_i32_0, %c0_i32_1 : i32, i32, i32
  }
  func.func @transform_1(%arg0: i32) -> (i32, i32, i32) {
    %c0_i32 = arith.constant 0 : i32
    %c0_i32_0 = arith.constant 0 : i32
    %c0_i32_1 = arith.constant 0 : i32
    %c0_i32_2 = arith.constant 0 : i32
    return %c0_i32, %c0_i32_0, %c0_i32_1 : i32, i32, i32
  }
  func.func @transform_2(%arg0: i32) -> (i32, i32) {
    %c0_i32 = arith.constant 0 : i32
    %c0_i32_0 = arith.constant 0 : i32
    %c0_i32_1 = arith.constant 0 : i32
    return %c0_i32, %c0_i32_0 : i32, i32
  }
  func.func @transform_3(%arg0: i32) -> (i32, i32) {
    %c0_i32 = arith.constant 0 : i32
    %c0_i32_0 = arith.constant 0 : i32
    %c0_i32_1 = arith.constant 0 : i32
    return %c0_i32, %c0_i32_0 : i32, i32
  }
  func.func @transform_4(%arg0: i32) -> (i32, i32) {
    %c0_i32 = arith.constant 0 : i32
    %c0_i32_0 = arith.constant 0 : i32
    %c0_i32_1 = arith.constant 0 : i32
    return %c0_i32, %c0_i32_0 : i32, i32
  }
  func.func @transform_5(%arg0: i32) -> (i32, i32) {
    %c0_i32 = arith.constant 0 : i32
    %c0_i32_0 = arith.constant 0 : i32
    %c0_i32_1 = arith.constant 0 : i32
    return %c0_i32, %c0_i32_0 : i32, i32
  }
  func.func @transform_6(%arg0: i32) -> (i32, i32) {
    %c0_i32 = arith.constant 0 : i32
    %c0_i32_0 = arith.constant 0 : i32
    %c0_i32_1 = arith.constant 0 : i32
    return %c0_i32, %c0_i32_0 : i32, i32
  }
  func.func @transform_7(%arg0: i32) -> (i32, i32) {
    %c0_i32 = arith.constant 0 : i32
    %c0_i32_0 = arith.constant 0 : i32
    %c0_i32_1 = arith.constant 0 : i32
    return %c0_i32, %c0_i32_0 : i32, i32
  }
  func.func @transform_8(%arg0: i32) -> (i32, i32) {
    %c0_i32 = arith.constant 0 : i32
    %c0_i32_0 = arith.constant 0 : i32
    %c0_i32_1 = arith.constant 0 : i32
    return %c0_i32, %c0_i32_0 : i32, i32
  }
}

</mosaic_0001>

<llo_original>
// kernel: forward.5
$region0: #{forward.5}
  #allocation0 [shape = 'u32[]', space=smem, size = 0x4, offset = 0x4, fixed_abs, tag = 'smem constant byte address 0x4 - core index']
  #allocation1 [shape = 'u32[72,128]{1,0:T(1,128)}', space=vmem, size = 0x9000, scoped, tag = 'internal scratch']
  #allocation2 [shape = 'f32[1,1]{1,0:T(1,128)S(1)}', space=vmem, size = 0x200, scoped, tag = 'scoped memory for forward.5']
  %s0 = inlined_call_operand.vmem [shape: bf16[2,8,64], index: 0, kind: input, shape index: {}]
  %s1 = inlined_call_operand.vmem [shape: f32[2,8,1], index: 1, kind: input, shape index: {}]
  %s2 = inlined_call_operand.vmem [shape: bf16[64,1], index: 2, kind: input, shape index: {}]
  %s3 = inlined_call_operand.<no memory space> [shape: f32[1,1], index: 3, kind: input, shape index: {}]
  %s4 = inlined_call_operand.vmem [shape: bf16[64,64], index: 4, kind: input, shape index: {}]
  %s5 = inlined_call_operand.vmem [shape: f32[1,64], index: 5, kind: input, shape index: {}]
  %s6 = inlined_call_operand.vmem [shape: bf16[64,6], index: 6, kind: input, shape index: {}]
  %s7 = inlined_call_operand.vmem [shape: f32[1,6], index: 7, kind: input, shape index: {}]
  %s8 = inlined_call_operand.hbm [shape: f32[2,6], index: 8, kind: output, shape index: {}]
  %s9 = sld [smem:[#allocation0]]
  $region42: #{forward.5} parent=0
    _
  %s11 = ssub.s32 1, %s9
  %s12 = scalar_select 0, %s11, %s9
  %v13 = vstv %s3
  %14 = vst [vmem:[#allocation2] sm:$0x1] %v13
  $region1: #{forward.5} parent=0
    #allocation3 [shape = 'u8[1024]{0}', space=vmem, size = 0x400, scoped, tag = 'output window, operand 0, single buffered']
    #allocation4 [shape = 's32[1]{0}', space=sflag, size = 0x4, scoped, tag = 'scoped memory for forward.5']
    %15 = vsyncpa [#allocation4], 0
    // Predicated region
    $region2: #{forward.5} parent=1 // pred_check
      _
    $region3: #{forward.5} parent=1 // pred_check_branch
      %17 = sbr.rel (0) target = $region5
    $region4: #{forward.5} parent=1 // pred_region
      _
    $region5: #{forward.5} parent=1 // pred_fallthru
      _
    // Predicated region
    $region6: #{forward.5} parent=1 // pred_check
      _
    $region7: #{forward.5} parent=1 // pred_check_branch
      %19 = sbr.rel (0) target = $region9
    $region8: #{forward.5} parent=1 // pred_region
      _
    $region9: #{forward.5} parent=1 // pred_fallthru
      _
    // Predicated region
    $region10: #{forward.5} parent=1 // pred_check
      _
    $region11: #{forward.5} parent=1 // pred_check_branch
      %21 = sbr.rel (0) target = $region13
    $region12: #{forward.5} parent=1 // pred_region
      _
    $region13: #{forward.5} parent=1 // pred_fallthru
      _
    // Predicated region
    $region14: #{forward.5} parent=1 // pred_check
      _
    $region15: #{forward.5} parent=1 // pred_check_branch
      %23 = sbr.rel (0) target = $region17
    $region16: #{forward.5} parent=1 // pred_region
      _
    $region17: #{forward.5} parent=1 // pred_fallthru
      _
    // Predicated region
    $region18: #{forward.5} parent=1 // pred_check
      _
    $region19: #{forward.5} parent=1 // pred_check_branch
      %25 = sbr.rel (0) target = $region21
    $region20: #{forward.5} parent=1 // pred_region
      _
    $region21: #{forward.5} parent=1 // pred_fallthru
      _
    // Predicated region
    $region22: #{forward.5} parent=1 // pred_check
      _
    $region23: #{forward.5} parent=1 // pred_check_branch
      %27 = sbr.rel (0) target = $region25
    $region24: #{forward.5} parent=1 // pred_region
      _
    $region25: #{forward.5} parent=1 // pred_fallthru
      _
    // Predicated region
    $region26: #{forward.5} parent=1 // pred_check
      _
    $region27: #{forward.5} parent=1 // pred_check_branch
      %29 = sbr.rel (0) target = $region29
    $region28: #{forward.5} parent=1 // pred_region
      _
    $region29: #{forward.5} parent=1 // pred_fallthru
      _
    // Predicated region
    $region30: #{forward.5} parent=1 // pred_check
      _
    $region31: #{forward.5} parent=1 // pred_check_branch
      %31 = sbr.rel (0) target = $region33
    $region32: #{forward.5} parent=1 // pred_region
      _
    $region33: #{forward.5} parent=1 // pred_fallthru
      _
    %v33 = vld [vmem:[%s0] sm:$0xf]
    %v34 = vld [vmem:[%s0 + $0x4] sm:$0xf]
    %v35 = vld [vmem:[%s1] sm:$0xff]
    %v36 = vld [vmem:[%s1 + $0x8] sm:$0xff]
    %v37 = vld [vmem:[%s2] sm:$0xf]
    %v38 = vld [vmem:[%s2 + $0x4] sm:$0xf]
    %v39 = vld [vmem:[%s2 + $0x8] sm:$0xf]
    %v40 = vld [vmem:[%s2 + $0xc] sm:$0xf]
    %v41 = vld [vmem:[%s2 + $0x10] sm:$0xf]
    %v42 = vld [vmem:[%s2 + $0x14] sm:$0xf]
    %v43 = vld [vmem:[%s2 + $0x18] sm:$0xf]
    %v44 = vld [vmem:[%s2 + $0x1c] sm:$0xf]
    %v45 = vld [vmem:[#allocation2] sm:$0x1]
    %v47 = vperm.slane %v45, 0
    %v51 = vunpack.c.l.b16 %v33
    %v52 = vunpack.c.l.b16 %v34
    %v53 = vpack.c.b16 %v52, %v51
    %v62 = vunpack.c.l.b16 %v37
    %v63 = vunpack.c.l.b16 %v38
    %v64 = vunpack.c.l.b16 %v39
    %v65 = vunpack.c.l.b16 %v40
    %v66 = vunpack.c.l.b16 %v41
    %v67 = vunpack.c.l.b16 %v42
    %v68 = vunpack.c.l.b16 %v43
    %v69 = vunpack.c.l.b16 %v44
    %v70 = vpack.c.b16 %v63, %v62
    %v71 = vpack.c.b16 %v65, %v64
    %v72 = vpack.c.b16 %v67, %v66
    %v73 = vpack.c.b16 %v69, %v68
    %vm78 = vcmask 523264
    %v80 = vsel %vm78, %v53, 0
    %82 = vmatpush.bf16.msra.mxu0 0
    %83 = vmatpush.bf16.msra.mxu0 0
    %84 = vmatpush.bf16.msra.mxu0 0
    %85 = vmatpush.bf16.msra.mxu0 0
    %86 = vmatpush.bf16.msra.mxu0 %v73
    %87 = vmatpush.bf16.msra.mxu0 %v72
    %88 = vmatpush.bf16.msra.mxu0 %v71
    %89 = vmatpush.bf16.msra.mxu0 %v70
    %90 = vmatmul.bf16.gmra.mxu0 %v80
    %v91 = vpop.f32.mrf.mxu0
    %v92 = vadd.f32 %v47, %v91
    %v93 = vpop.f32.mrf.mxu0
    %v94 = vadd.f32 %v47, %v93
    %95 = vdwg.mxu0
    %vm96 = vcmp.gt.f32.partialorder %v35, 0.0
    %vm97 = vcmp.gt.f32.partialorder %v36, 0.0
    %v98 = vsel %vm96, %v92, -1e+09
    %v99 = vsel %vm97, %v94, -1e+09
    %vm100 = vcmask 7168
    %v101 = vsel %vm100, %v98, -inf
    %v102 = vrot.slane %v101, 4
    %v103 = vmax.f32 %v101, %v102
    %v104 = vrot.slane %v103, 2
    %v105 = vmax.f32 %v103, %v104
    %v106 = vrot.slane %v105, 1
    %v107 = vmax.f32 %v105, %v106
    %v108 = vsel %vm100, %v99, -inf
    %v109 = vrot.slane %v108, 4
    %v110 = vmax.f32 %v108, %v109
    %v111 = vrot.slane %v110, 2
    %v112 = vmax.f32 %v110, %v111
    %v113 = vrot.slane %v112, 1
    %v114 = vmax.f32 %v112, %v113
    %v115 = vsub.f32 %v98, %v107
    %v116 = vsub.f32 %v99, %v114
    %v117 = vmul.f32 %v115, 1.442695
    %v118 = vpow.pop %v117
    %v119 = vmul.f32 %v116, 1.442695
    %v120 = vpow.pop %v119
    %v121 = vsel %vm100, %v118, 0.0
    %v122 = vrot.slane %v121, 4
    %v123 = vadd.f32 %v121, %v122
    %v124 = vrot.slane %v123, 2
    %v125 = vadd.f32 %v123, %v124
    %v126 = vrot.slane %v125, 1
    %v127 = vadd.f32 %v125, %v126
    %v128 = vsel %vm100, %v120, 0.0
    %v129 = vrot.slane %v128, 4
    %v130 = vadd.f32 %v128, %v129
    %v131 = vrot.slane %v130, 2
    %v132 = vadd.f32 %v130, %v131
    %v133 = vrot.slane %v132, 1
    %v134 = vadd.f32 %v132, %v133
    %v135 = vrcp.pop %v127
    %v136 = vmul.f32 %v127, %v135
    %v137 = vsub.f32 1.0, %v136
    %v138 = vmul.f32 %v135, %v137
    %v139 = vadd.f32 %v135, %v138
    %vm140 = vweird.f32 %v127
    %vm141 = vweird.f32 %v135
    %vm142 = vmor %vm140, %vm141
    %v143 = vsel %vm142, %v135, %v139
    %v144 = vand.u32 2147483647, %v127
    %vm145 = vcmp.eq.f32.partialorder %v144, 8.507059e+37
    %v146 = vand.u32 %v127, 2147483648
    %v147 = vor.u32 1.1754944e-38, %v146
    %v148 = vsel %vm145, %v147, %v143
    %v149 = vmul.f32 %v118, %v148
    %v150 = vrcp.pop %v134
    %v151 = vmul.f32 %v134, %v150
    %v152 = vsub.f32 1.0, %v151
    %v153 = vmul.f32 %v150, %v152
    %v154 = vadd.f32 %v150, %v153
    %vm155 = vweird.f32 %v134
    %vm156 = vweird.f32 %v150
    %vm157 = vmor %vm155, %vm156
    %v158 = vsel %vm157, %v150, %v154
    %v159 = vand.u32 2147483647, %v134
    %vm160 = vcmp.eq.f32.partialorder %v159, 8.507059e+37
    %v161 = vand.u32 %v134, 2147483648
    %v162 = vor.u32 1.1754944e-38, %v161
    %v163 = vsel %vm160, %v162, %v158
    %v164 = vmul.f32 %v120, %v163
    %v165 = vunpack.c.l.bf16 %v33
    %v166 = vunpack.c.l.bf16 %v34
    %168 = vset.pattern.permute.xlu0 0
    %169 = vperm.xlu0 %168, %v149
    %v170 = vpop.permute.xlu0 %169
    %173 = vset.pattern.permute.xlu0 0
    %174 = vperm.xlu0 %173, %v164
    %v175 = vpop.permute.xlu0 %174
    %v177 = vmul.f32 %v170, %v165
    %v178 = vmul.f32 %v175, %v166
    %v179 = vsel %vm78, %v177, 0.0
    %v180 = vrot.slane %v179, 4
    %v181 = vadd.f32 %v179, %v180
    %v182 = vrot.slane %v181, 2
    %v183 = vadd.f32 %v181, %v182
    %v184 = vrot.slane %v183, 1
    %v185 = vadd.f32 %v183, %v184
    %v186 = vsel %vm78, %v178, 0.0
    %v187 = vrot.slane %v186, 4
    %v188 = vadd.f32 %v186, %v187
    %v189 = vrot.slane %v188, 2
    %v190 = vadd.f32 %v188, %v189
    %v191 = vrot.slane %v190, 1
    %v192 = vadd.f32 %v190, %v191
    %v193 = vpack.c.bf16 %v185, %v185
    %v194 = vpack.c.bf16 %v192, %v192
    %v195 = vld [vmem:[%s4] sm:$0xf]
    %v196 = vld [vmem:[%s4 + $0x4] sm:$0xf]
    %v197 = vld [vmem:[%s4 + $0x8] sm:$0xf]
    %v198 = vld [vmem:[%s4 + $0xc] sm:$0xf]
    %v199 = vld [vmem:[%s4 + $0x10] sm:$0xf]
    %v200 = vld [vmem:[%s4 + $0x14] sm:$0xf]
    %v201 = vld [vmem:[%s4 + $0x18] sm:$0xf]
    %v202 = vld [vmem:[%s4 + $0x1c] sm:$0xf]
    %v203 = vld [vmem:[%s5] sm:$0x1]
    %v205 = vperm.slane %v203, 0
    %v209 = vunpack.c.l.b16 %v193
    %v210 = vunpack.c.l.b16 %v194
    %vm211 = vcmask 1041409
    %v212 = vsel %vm211, %v210, %v209
    %v213 = vpack.c.b16 %v212, %v212
    %v222 = vunpack.c.l.b16 %v195
    %v223 = vunpack.c.l.b16 %v196
    %v224 = vunpack.c.l.b16 %v197
    %v225 = vunpack.c.l.b16 %v198
    %v226 = vunpack.c.l.b16 %v199
    %v227 = vunpack.c.l.b16 %v200
    %v228 = vunpack.c.l.b16 %v201
    %v229 = vunpack.c.l.b16 %v202
    %v230 = vpack.c.b16 %v223, %v222
    %v231 = vpack.c.b16 %v225, %v224
    %v232 = vpack.c.b16 %v227, %v226
    %v233 = vpack.c.b16 %v229, %v228
    %v239 = vsel %vm78, %v213, 0
    %241 = vmatpush.bf16.msra.mxu0 0
    %242 = vmatpush.bf16.msra.mxu0 0
    %243 = vmatpush.bf16.msra.mxu0 0
    %244 = vmatpush.bf16.msra.mxu0 0
    %245 = vmatpush.bf16.msra.mxu0 %v233
    %246 = vmatpush.bf16.msra.mxu0 %v232
    %247 = vmatpush.bf16.msra.mxu0 %v231
    %248 = vmatpush.bf16.msra.mxu0 %v230
    %249 = vmatmul.bf16.gmra.mxu0 %v239
    %v250 = vpop.f32.mrf.mxu0
    %v251 = vadd.f32 %v205, %v250
    %v252 = vpop.f32.mrf.mxu0
    %253 = vdwg.mxu0
    %v254 = vmax.f32 %v251, 0.0
    %v255 = vpack.c.bf16 %v254, %v254
    %v256 = vld [vmem:[%s6] sm:$0xf]
    %v257 = vld [vmem:[%s6 + $0x4] sm:$0xf]
    %v258 = vld [vmem:[%s6 + $0x8] sm:$0xf]
    %v259 = vld [vmem:[%s6 + $0xc] sm:$0xf]
    %v260 = vld [vmem:[%s6 + $0x10] sm:$0xf]
    %v261 = vld [vmem:[%s6 + $0x14] sm:$0xf]
    %v262 = vld [vmem:[%s6 + $0x18] sm:$0xf]
    %v263 = vld [vmem:[%s6 + $0x1c] sm:$0xf]
    %v264 = vld [vmem:[%s7] sm:$0x1]
    %v266 = vperm.slane %v264, 0
    %v276 = vunpack.c.l.b16 %v256
    %v277 = vunpack.c.l.b16 %v257
    %v278 = vunpack.c.l.b16 %v258
    %v279 = vunpack.c.l.b16 %v259
    %v280 = vunpack.c.l.b16 %v260
    %v281 = vunpack.c.l.b16 %v261
    %v282 = vunpack.c.l.b16 %v262
    %v283 = vunpack.c.l.b16 %v263
    %v284 = vpack.c.b16 %v277, %v276
    %v285 = vpack.c.b16 %v279, %v278
    %v286 = vpack.c.b16 %v281, %v280
    %v287 = vpack.c.b16 %v283, %v282
    %v293 = vsel %vm78, %v255, 0
    %295 = vmatpush.bf16.msra.mxu0 0
    %296 = vmatpush.bf16.msra.mxu0 0
    %297 = vmatpush.bf16.msra.mxu0 0
    %298 = vmatpush.bf16.msra.mxu0 0
    %299 = vmatpush.bf16.msra.mxu0 %v287
    %300 = vmatpush.bf16.msra.mxu0 %v286
    %301 = vmatpush.bf16.msra.mxu0 %v285
    %302 = vmatpush.bf16.msra.mxu0 %v284
    %303 = vmatmul.bf16.gmra.mxu0 %v293
    %v304 = vpop.f32.mrf.mxu0
    %v305 = vadd.f32 %v266, %v304
    %v306 = vpop.f32.mrf.mxu0
    %307 = vdwg.mxu0
    %vm308 = vcmask 41984
    %309 = vst.msk [vmem:[#allocation3] sm:$0x3] %vm308, %v305
    // Predicated region
    $region34: #{forward.5} parent=1 // pred_check
      _
    $region35: #{forward.5} parent=1 // pred_check_branch
      %311 = sbr.rel (0) target = $region37
    $region36: #{forward.5} parent=1 // pred_region
      %313 = vsyncadd [#allocation4], 0
      %s315 = sshll.u32 [#allocation3], 4
      %s316 = int_to_ptr.vmem [resolvable:$true] %s315
      %s317 = sshll.u32 %s8, 4
      %s318 = int_to_ptr.hbm [resolvable:$true] %s317
      %320 = dma.vmem_to_hbm [thread:$0]  %s316, 32, %s318, [#allocation4]
    $region37: #{forward.5} parent=1 // pred_fallthru
      _
    // Predicated region
    $region38: #{forward.5} parent=1 // pred_check
      _
    $region39: #{forward.5} parent=1 // pred_check_branch
      %322 = sbr.rel (0) target = $region41
    $region40: #{forward.5} parent=1 // pred_region
      %324 = dma.done [#allocation4], 32
    $region41: #{forward.5} parent=1 // pred_fallthru
      _
    %325 = vsyncpa [#allocation4], 1

// kernel: forward.3
$region0: #{forward.3}
  #allocation0 [shape = 'u32[]', space=smem, size = 0x4, offset = 0x4, fixed_abs, tag = 'smem constant byte address 0x4 - core index']
  #allocation1 [shape = 'u32[72,128]{1,0:T(1,128)}', space=vmem, size = 0x9000, scoped, tag = 'internal scratch']
  %s0 = inlined_call_operand.vmem [shape: bf16[2,8,64], index: 0, kind: input, shape index: {}]
  %s1 = inlined_call_operand.vmem [shape: f32[2,1,8], index: 1, kind: input, shape index: {}]
  %s2 = inlined_call_operand.vmem [shape: bf16[64,192], index: 2, kind: input, shape index: {}]
  %s3 = inlined_call_operand.vmem [shape: f32[1,192], index: 3, kind: input, shape index: {}]
  %s4 = inlined_call_operand.vmem [shape: bf16[64,64], index: 4, kind: input, shape index: {}]
  %s5 = inlined_call_operand.vmem [shape: f32[1,64], index: 5, kind: input, shape index: {}]
  %s6 = inlined_call_operand.vmem [shape: f32[2,64], index: 6, kind: input, shape index: {}]
  %s7 = inlined_call_operand.vmem [shape: bf16[64,128], index: 7, kind: input, shape index: {}]
  %s8 = inlined_call_operand.vmem [shape: f32[1,128], index: 8, kind: input, shape index: {}]
  %s9 = inlined_call_operand.vmem [shape: bf16[128,64], index: 9, kind: input, shape index: {}]
  %s10 = inlined_call_operand.vmem [shape: f32[1,64], index: 10, kind: input, shape index: {}]
  %s11 = inlined_call_operand.vmem [shape: f32[2,64], index: 11, kind: input, shape index: {}]
  %s12 = inlined_call_operand.vmem [shape: bf16[2,8,64], index: 12, kind: output, shape index: {}]
  %s13 = sld [smem:[#allocation0]]
  $region58: #{forward.3} parent=0
    _
  %s15 = ssub.s32 1, %s13
  %s16 = scalar_select 0, %s15, %s13
  // Predicated region
  $region2: #{forward.3} parent=0 // pred_check
    _
  $region3: #{forward.3} parent=0 // pred_check_branch
    %18 = sbr.rel (0) target = $region5
  $region4: #{forward.3} parent=0 // pred_region
    _
  $region5: #{forward.3} parent=0 // pred_fallthru
    _
  // Predicated region
  $region6: #{forward.3} parent=0 // pred_check
    _
  $region7: #{forward.3} parent=0 // pred_check_branch
    %20 = sbr.rel (0) target = $region9
  $region8: #{forward.3} parent=0 // pred_region
    _
  $region9: #{forward.3} parent=0 // pred_fallthru
    _
  // Predicated region
  $region10: #{forward.3} parent=0 // pred_check
    _
  $region11: #{forward.3} parent=0 // pred_check_branch
    %22 = sbr.rel (0) target = $region13
  $region12: #{forward.3} parent=0 // pred_region
    _
  $region13: #{forward.3} parent=0 // pred_fallthru
    _
  // Predicated region
  $region14: #{forward.3} parent=0 // pred_check
    _
  $region15: #{forward.3} parent=0 // pred_check_branch
    %24 = sbr.rel (0) target = $region17
  $region16: #{forward.3} parent=0 // pred_region
    _
  $region17: #{forward.3} parent=0 // pred_fallthru
    _
  // Predicated region
  $region18: #{forward.3} parent=0 // pred_check
    _
  $region19: #{forward.3} parent=0 // pred_check_branch
    %26 = sbr.rel (0) target = $region21
  $region20: #{forward.3} parent=0 // pred_region
    _
  $region21: #{forward.3} parent=0 // pred_fallthru
    _
  // Predicated region
  $region22: #{forward.3} parent=0 // pred_check
    _
  $region23: #{forward.3} parent=0 // pred_check_branch
    %28 = sbr.rel (0) target = $region25
  $region24: #{forward.3} parent=0 // pred_region
    _
  $region25: #{forward.3} parent=0 // pred_fallthru
    _
  // Predicated region
  $region26: #{forward.3} parent=0 // pred_check
    _
  $region27: #{forward.3} parent=0 // pred_check_branch
    %30 = sbr.rel (0) target = $region29
  $region28: #{forward.3} parent=0 // pred_region
    _
  $region29: #{forward.3} parent=0 // pred_fallthru
    _
  // Predicated region
  $region30: #{forward.3} parent=0 // pred_check
    _
  $region31: #{forward.3} parent=0 // pred_check_branch
    %32 = sbr.rel (0) target = $region33
  $region32: #{forward.3} parent=0 // pred_region
    _
  $region33: #{forward.3} parent=0 // pred_fallthru
    _
  // Predicated region
  $region34: #{forward.3} parent=0 // pred_check
    _
  $region35: #{forward.3} parent=0 // pred_check_branch
    %34 = sbr.rel (0) target = $region37
  $region36: #{forward.3} parent=0 // pred_region
    _
  $region37: #{forward.3} parent=0 // pred_fallthru
    _
  // Predicated region
  $region38: #{forward.3} parent=0 // pred_check
    _
  $region39: #{forward.3} parent=0 // pred_check_branch
    %36 = sbr.rel (0) target = $region41
  $region40: #{forward.3} parent=0 // pred_region
    _
  $region41: #{forward.3} parent=0 // pred_fallthru
    _
  // Predicated region
  $region42: #{forward.3} parent=0 // pred_check
    _
  $region43: #{forward.3} parent=0 // pred_check_branch
    %38 = sbr.rel (0) target = $region45
  $region44: #{forward.3} parent=0 // pred_region
    _
  $region45: #{forward.3} parent=0 // pred_fallthru
    _
  // Predicated region
  $region46: #{forward.3} parent=0 // pred_check
    _
  $region47: #{forward.3} parent=0 // pred_check_branch
    %40 = sbr.rel (0) target = $region49
  $region48: #{forward.3} parent=0 // pred_region
    _
  $region49: #{forward.3} parent=0 // pred_fallthru
    _
  %v42 = vld [vmem:[%s0] sm:$0xf]
  %v43 = vld [vmem:[%s0 + $0x4] sm:$0xf]
  %v44 = vld [vmem:[%s1] sm:$0x1]
  %v45 = vld [vmem:[%s1 + $0x1] sm:$0x1]
  %v46 = vld [vmem:[%s2] sm:$0xff]
  %v47 = vld [vmem:[%s2 + $0x8] sm:$0xff]
  %v48 = vld [vmem:[%s2 + $0x10] sm:$0xff]
  %v49 = vld [vmem:[%s2 + $0x18] sm:$0xff]
  %v50 = vld [vmem:[%s2 + $0x20] sm:$0xff]
  %v51 = vld [vmem:[%s2 + $0x28] sm:$0xff]
  %v52 = vld [vmem:[%s2 + $0x30] sm:$0xff]
  %v53 = vld [vmem:[%s2 + $0x38] sm:$0xff]
  %v54 = vld [vmem:[%s3] sm:$0x3]
  %v56 = vperm.slane %v54, 0
  %v57 = vperm.slane %v54, 1
  %v62 = vunpack.c.l.b16 %v42
  %v63 = vunpack.c.l.b16 %v43
  %v64 = vpack.c.b16 %v63, %v62
  %v73 = vunpack.c.l.b16 %v46
  %v74 = vunpack.c.h.b16 %v46
  %v75 = vunpack.c.l.b16 %v47
  %v76 = vunpack.c.h.b16 %v47
  %v77 = vunpack.c.l.b16 %v48
  %v78 = vunpack.c.h.b16 %v48
  %v79 = vunpack.c.l.b16 %v49
  %v80 = vunpack.c.h.b16 %v49
  %v81 = vunpack.c.l.b16 %v50
  %v82 = vunpack.c.h.b16 %v50
  %v83 = vunpack.c.l.b16 %v51
  %v84 = vunpack.c.h.b16 %v51
  %v85 = vunpack.c.l.b16 %v52
  %v86 = vunpack.c.h.b16 %v52
  %v87 = vunpack.c.l.b16 %v53
  %v88 = vunpack.c.h.b16 %v53
  %v89 = vpack.c.b16 %v75, %v73
  %v90 = vpack.c.b16 %v76, %v74
  %v91 = vpack.c.b16 %v79, %v77
  %v92 = vpack.c.b16 %v80, %v78
  %v93 = vpack.c.b16 %v83, %v81
  %v94 = vpack.c.b16 %v84, %v82
  %v95 = vpack.c.b16 %v87, %v85
  %v96 = vpack.c.b16 %v88, %v86
  %vm105 = vcmask 523264
  %v107 = vsel %vm105, %v64, 0
  %109 = vmatpush.bf16.msra.mxu0 0
  %110 = vmatpush.bf16.msra.mxu0 0
  %111 = vmatpush.bf16.msra.mxu0 0
  %112 = vmatpush.bf16.msra.mxu0 0
  %113 = vmatpush.bf16.msra.mxu0 %v95
  %114 = vmatpush.bf16.msra.mxu0 %v93
  %115 = vmatpush.bf16.msra.mxu0 %v91
  %116 = vmatpush.bf16.msra.mxu0 %v89
  %117 = vmatmul.bf16.gmra.mxu0 %v107
  %v118 = vpop.f32.mrf.mxu0
  %v119 = vadd.f32 %v56, %v118
  %v120 = vpop.f32.mrf.mxu0
  %v121 = vadd.f32 %v56, %v120
  %122 = vdwg.mxu0
  %123 = vmatpush.bf16.msra.mxu0 0
  %124 = vmatpush.bf16.msra.mxu0 0
  %125 = vmatpush.bf16.msra.mxu0 0
  %126 = vmatpush.bf16.msra.mxu0 0
  %127 = vmatpush.bf16.msra.mxu0 %v96
  %128 = vmatpush.bf16.msra.mxu0 %v94
  %129 = vmatpush.bf16.msra.mxu0 %v92
  %130 = vmatpush.bf16.msra.mxu0 %v90
  %131 = vmatmul.bf16.gmra.mxu0 %v107
  %v132 = vpop.f32.mrf.mxu0
  %v133 = vadd.f32 %v57, %v132
  %v134 = vpop.f32.mrf.mxu0
  %v135 = vadd.f32 %v57, %v134
  %136 = vdwg.mxu0
  %v137 = vpack.c.bf16 %v119, %v119
  %v138 = vpack.c.bf16 %v121, %v121
  %v139 = vpack.c.bf16 %v133, %v133
  %v140 = vpack.c.bf16 %v135, %v135
  %v143 = vperm.slane %v44, 0
  %v144 = vperm.slane %v45, 0
  %v148 = vunpack.c.l.b16 %v137
  %v149 = vpack.c.b16 %v148, %v148
  %150 = vrot.lane.b32.xlu0 %v149, 64
  %v151 = vpop.permute.xlu0 %150
  %vm152 = vcmask 130048
  %v154 = vsel %vm152, %v137, 0
  %v157 = vsel %vm152, %v151, 0
  %159 = vmatpush.bf16.xpose.msra.mxu0 0
  %160 = vmatpush.bf16.xpose.msra.mxu0 0
  %161 = vmatpush.bf16.xpose.msra.mxu0 0
  %162 = vmatpush.bf16.xpose.msra.mxu0 0
  %163 = vmatpush.bf16.xpose.msra.mxu0 0
  %164 = vmatpush.bf16.xpose.msra.mxu0 0
  %165 = vmatpush.bf16.xpose.msra.mxu0 0
  %166 = vmatpush.bf16.xpose.msra.mxu0 %v157
  %167 = vmatmul.bf16.gmra.mxu0 %v154
  %v168 = vpop.f32.mrf.mxu0
  %v169 = vadd.f32 %v143, %v168
  %v170 = vpop.f32.mrf.mxu0
  %171 = vdwg.mxu0
  %v173 = vunpack.c.l.b16 %v138
  %v174 = vpack.c.b16 %v173, %v173
  %175 = vrot.lane.b32.xlu0 %v174, 64
  %v176 = vpop.permute.xlu0 %175
  %v178 = vsel %vm152, %v138, 0
  %v181 = vsel %vm152, %v176, 0
  %183 = vmatpush.bf16.xpose.msra.mxu0 0
  %184 = vmatpush.bf16.xpose.msra.mxu0 0
  %185 = vmatpush.bf16.xpose.msra.mxu0 0
  %186 = vmatpush.bf16.xpose.msra.mxu0 0
  %187 = vmatpush.bf16.xpose.msra.mxu0 0
  %188 = vmatpush.bf16.xpose.msra.mxu0 0
  %189 = vmatpush.bf16.xpose.msra.mxu0 0
  %190 = vmatpush.bf16.xpose.msra.mxu0 %v181
  %191 = vmatmul.bf16.gmra.mxu0 %v178
  %v192 = vpop.f32.mrf.mxu0
  %v193 = vadd.f32 %v144, %v192
  %v194 = vpop.f32.mrf.mxu0
  %195 = vdwg.mxu0
  %vm196 = vcmask 64512
  %v197 = vsel %vm196, %v169, -inf
  %198 = vmax.xlane.f32.xlu0 %v197
  %v199 = vpop.xlane.xlu0 %198
  %v200 = vsel %vm196, %v193, -inf
  %201 = vmax.xlane.f32.xlu0 %v200
  %v202 = vpop.xlane.xlu0 %201
  %v203 = vsub.f32 %v169, %v199
  %v204 = vsub.f32 %v193, %v202
  %v205 = vmul.f32 %v203, 1.442695
  %v206 = vpow.pop %v205
  %v207 = vmul.f32 %v204, 1.442695
  %v208 = vpow.pop %v207
  %v209 = vsel %vm196, %v206, 0.0
  %210 = vadd.xlane.f32.xlu0 %v209
  %v211 = vpop.xlane.xlu0 %210
  %v212 = vsel %vm196, %v208, 0.0
  %213 = vadd.xlane.f32.xlu0 %v212
  %v214 = vpop.xlane.xlu0 %213
  %v215 = vrcp.pop %v211
  %v216 = vrcp.pop %v214
  %v217 = vmul.f32 %v206, %v215
  %v218 = vmul.f32 %v208, %v216
  %v219 = vpack.c.bf16 %v217, %v217
  %v220 = vpack.c.bf16 %v218, %v218
  %v222 = vsel %vm196, %v219, 0
  %vm224 = vcmask 1043456
  %v226 = vsel %vm224, %v139, 0
  %228 = vmatpush.bf16.msra.mxu0 0
  %229 = vmatpush.bf16.msra.mxu0 0
  %230 = vmatpush.bf16.msra.mxu0 0
  %231 = vmatpush.bf16.msra.mxu0 0
  %232 = vmatpush.bf16.msra.mxu0 0
  %233 = vmatpush.bf16.msra.mxu0 0
  %234 = vmatpush.bf16.msra.mxu0 0
  %235 = vmatpush.bf16.msra.mxu0 %v226
  %236 = vmatmul.bf16.gmra.mxu0 %v222
  %v237 = vpop.f32.mrf.mxu0
  %v238 = vadd.f32 0.0, %v237
  %v239 = vpop.f32.mrf.mxu0
  %240 = vdwg.mxu0
  %v242 = vsel %vm196, %v220, 0
  %v245 = vsel %vm224, %v140, 0
  %247 = vmatpush.bf16.msra.mxu0 0
  %248 = vmatpush.bf16.msra.mxu0 0
  %249 = vmatpush.bf16.msra.mxu0 0
  %250 = vmatpush.bf16.msra.mxu0 0
  %251 = vmatpush.bf16.msra.mxu0 0
  %252 = vmatpush.bf16.msra.mxu0 0
  %253 = vmatpush.bf16.msra.mxu0 0
  %254 = vmatpush.bf16.msra.mxu0 %v245
  %255 = vmatmul.bf16.gmra.mxu0 %v242
  %v256 = vpop.f32.mrf.mxu0
  %v257 = vadd.f32 0.0, %v256
  %v258 = vpop.f32.mrf.mxu0
  %259 = vdwg.mxu0
  %260 = vrot.lane.b32.xlu0 %v149, 112
  %v261 = vpop.permute.xlu0 %260
  %262 = vrot.lane.b32.xlu0 %v149, 48
  %v263 = vpop.permute.xlu0 %262
  %v265 = vsel %vm152, %v261, 0
  %v268 = vsel %vm152, %v263, 0
  %270 = vmatpush.bf16.xpose.msra.mxu0 0
  %271 = vmatpush.bf16.xpose.msra.mxu0 0
  %272 = vmatpush.bf16.xpose.msra.mxu0 0
  %273 = vmatpush.bf16.xpose.msra.mxu0 0
  %274 = vmatpush.bf16.xpose.msra.mxu0 0
  %275 = vmatpush.bf16.xpose.msra.mxu0 0
  %276 = vmatpush.bf16.xpose.msra.mxu0 0
  %277 = vmatpush.bf16.xpose.msra.mxu0 %v268
  %278 = vmatmul.bf16.gmra.mxu0 %v265
  %v279 = vpop.f32.mrf.mxu0
  %v280 = vadd.f32 %v143, %v279
  %v281 = vpop.f32.mrf.mxu0
  %282 = vdwg.mxu0
  %283 = vrot.lane.b32.xlu0 %v174, 112
  %v284 = vpop.permute.xlu0 %283
  %285 = vrot.lane.b32.xlu0 %v174, 48
  %v286 = vpop.permute.xlu0 %285
  %v288 = vsel %vm152, %v284, 0
  %v291 = vsel %vm152, %v286, 0
  %293 = vmatpush.bf16.xpose.msra.mxu0 0
  %294 = vmatpush.bf16.xpose.msra.mxu0 0
  %295 = vmatpush.bf16.xpose.msra.mxu0 0
  %296 = vmatpush.bf16.xpose.msra.mxu0 0
  %297 = vmatpush.bf16.xpose.msra.mxu0 0
  %298 = vmatpush.bf16.xpose.msra.mxu0 0
  %299 = vmatpush.bf16.xpose.msra.mxu0 0
  %300 = vmatpush.bf16.xpose.msra.mxu0 %v291
  %301 = vmatmul.bf16.gmra.mxu0 %v288
  %v302 = vpop.f32.mrf.mxu0
  %v303 = vadd.f32 %v144, %v302
  %v304 = vpop.f32.mrf.mxu0
  %305 = vdwg.mxu0
  %v306 = vsel %vm196, %v280, -inf
  %307 = vmax.xlane.f32.xlu0 %v306
  %v308 = vpop.xlane.xlu0 %307
  %v309 = vsel %vm196, %v303, -inf
  %310 = vmax.xlane.f32.xlu0 %v309
  %v311 = vpop.xlane.xlu0 %310
  %v312 = vsub.f32 %v280, %v308
  %v313 = vsub.f32 %v303, %v311
  %v314 = vmul.f32 %v312, 1.442695
  %v315 = vpow.pop %v314
  %v316 = vmul.f32 %v313, 1.442695
  %v317 = vpow.pop %v316
  %v318 = vsel %vm196, %v315, 0.0
  %319 = vadd.xlane.f32.xlu0 %v318
  %v320 = vpop.xlane.xlu0 %319
  %v321 = vsel %vm196, %v317, 0.0
  %322 = vadd.xlane.f32.xlu0 %v321
  %v323 = vpop.xlane.xlu0 %322
  %v324 = vrcp.pop %v320
  %v325 = vrcp.pop %v323
  %v326 = vmul.f32 %v315, %v324
  %v327 = vmul.f32 %v317, %v325
  %v328 = vpack.c.bf16 %v326, %v326
  %v329 = vpack.c.bf16 %v327, %v327
  %v331 = vunpack.c.l.b16 %v139
  %v332 = vpack.c.b16 %v331, %v331
  %333 = vrot.lane.b32.xlu0 %v332, 112
  %v334 = vpop.permute.xlu0 %333
  %v336 = vsel %vm196, %v328, 0
  %v339 = vsel %vm224, %v334, 0
  %341 = vmatpush.bf16.msra.mxu0 0
  %342 = vmatpush.bf16.msra.mxu0 0
  %343 = vmatpush.bf16.msra.mxu0 0
  %344 = vmatpush.bf16.msra.mxu0 0
  %345 = vmatpush.bf16.msra.mxu0 0
  %346 = vmatpush.bf16.msra.mxu0 0
  %347 = vmatpush.bf16.msra.mxu0 0
  %348 = vmatpush.bf16.msra.mxu0 %v339
  %349 = vmatmul.bf16.gmra.mxu0 %v336
  %v350 = vpop.f32.mrf.mxu0
  %v351 = vadd.f32 0.0, %v350
  %v352 = vpop.f32.mrf.mxu0
  %353 = vdwg.mxu0
  %v355 = vunpack.c.l.b16 %v140
  %v356 = vpack.c.b16 %v355, %v355
  %357 = vrot.lane.b32.xlu0 %v356, 112
  %v358 = vpop.permute.xlu0 %357
  %v360 = vsel %vm196, %v329, 0
  %v363 = vsel %vm224, %v358, 0
  %365 = vmatpush.bf16.msra.mxu0 0
  %366 = vmatpush.bf16.msra.mxu0 0
  %367 = vmatpush.bf16.msra.mxu0 0
  %368 = vmatpush.bf16.msra.mxu0 0
  %369 = vmatpush.bf16.msra.mxu0 0
  %370 = vmatpush.bf16.msra.mxu0 0
  %371 = vmatpush.bf16.msra.mxu0 0
  %372 = vmatpush.bf16.msra.mxu0 %v363
  %373 = vmatmul.bf16.gmra.mxu0 %v360
  %v374 = vpop.f32.mrf.mxu0
  %v375 = vadd.f32 0.0, %v374
  %v376 = vpop.f32.mrf.mxu0
  %377 = vdwg.mxu0
  %378 = vrot.lane.b32.xlu0 %v149, 96
  %v379 = vpop.permute.xlu0 %378
  %380 = vrot.lane.b32.xlu0 %v149, 32
  %v381 = vpop.permute.xlu0 %380
  %v383 = vsel %vm152, %v379, 0
  %v386 = vsel %vm152, %v381, 0
  %388 = vmatpush.bf16.xpose.msra.mxu0 0
  %389 = vmatpush.bf16.xpose.msra.mxu0 0
  %390 = vmatpush.bf16.xpose.msra.mxu0 0
  %391 = vmatpush.bf16.xpose.msra.mxu0 0
  %392 = vmatpush.bf16.xpose.msra.mxu0 0
  %393 = vmatpush.bf16.xpose.msra.mxu0 0
  %394 = vmatpush.bf16.xpose.msra.mxu0 0
  %395 = vmatpush.bf16.xpose.msra.mxu0 %v386
  %396 = vmatmul.bf16.gmra.mxu0 %v383
  %v397 = vpop.f32.mrf.mxu0
  %v398 = vadd.f32 %v143, %v397
  %v399 = vpop.f32.mrf.mxu0
  %400 = vdwg.mxu0
  %401 = vrot.lane.b32.xlu0 %v174, 96
  %v402 = vpop.permute.xlu0 %401
  %403 = vrot.lane.b32.xlu0 %v174, 32
  %v404 = vpop.permute.xlu0 %403
  %v406 = vsel %vm152, %v402, 0
  %v409 = vsel %vm152, %v404, 0
  %411 = vmatpush.bf16.xpose.msra.mxu0 0
  %412 = vmatpush.bf16.xpose.msra.mxu0 0
  %413 = vmatpush.bf16.xpose.msra.mxu0 0
  %414 = vmatpush.bf16.xpose.msra.mxu0 0
  %415 = vmatpush.bf16.xpose.msra.mxu0 0
  %416 = vmatpush.bf16.xpose.msra.mxu0 0
  %417 = vmatpush.bf16.xpose.msra.mxu0 0
  %418 = vmatpush.bf16.xpose.msra.mxu0 %v409
  %419 = vmatmul.bf16.gmra.mxu0 %v406
  %v420 = vpop.f32.mrf.mxu0
  %v421 = vadd.f32 %v144, %v420
  %v422 = vpop.f32.mrf.mxu0
  %423 = vdwg.mxu0
  %v424 = vsel %vm196, %v398, -inf
  %425 = vmax.xlane.f32.xlu0 %v424
  %v426 = vpop.xlane.xlu0 %425
  %v427 = vsel %vm196, %v421, -inf
  %428 = vmax.xlane.f32.xlu0 %v427
  %v429 = vpop.xlane.xlu0 %428
  %v430 = vsub.f32 %v398, %v426
  %v431 = vsub.f32 %v421, %v429
  %v432 = vmul.f32 %v430, 1.442695
  %v433 = vpow.pop %v432
  %v434 = vmul.f32 %v431, 1.442695
  %v435 = vpow.pop %v434
  %v436 = vsel %vm196, %v433, 0.0
  %437 = vadd.xlane.f32.xlu0 %v436
  %v438 = vpop.xlane.xlu0 %437
  %v439 = vsel %vm196, %v435, 0.0
  %440 = vadd.xlane.f32.xlu0 %v439
  %v441 = vpop.xlane.xlu0 %440
  %v442 = vrcp.pop %v438
  %v443 = vrcp.pop %v441
  %v444 = vmul.f32 %v433, %v442
  %v445 = vmul.f32 %v435, %v443
  %v446 = vpack.c.bf16 %v444, %v444
  %v447 = vpack.c.bf16 %v445, %v445
  %448 = vrot.lane.b32.xlu0 %v332, 96
  %v449 = vpop.permute.xlu0 %448
  %v451 = vsel %vm196, %v446, 0
  %v454 = vsel %vm224, %v449, 0
  %456 = vmatpush.bf16.msra.mxu0 0
  %457 = vmatpush.bf16.msra.mxu0 0
  %458 = vmatpush.bf16.msra.mxu0 0
  %459 = vmatpush.bf16.msra.mxu0 0
  %460 = vmatpush.bf16.msra.mxu0 0
  %461 = vmatpush.bf16.msra.mxu0 0
  %462 = vmatpush.bf16.msra.mxu0 0
  %463 = vmatpush.bf16.msra.mxu0 %v454
  %464 = vmatmul.bf16.gmra.mxu0 %v451
  %v465 = vpop.f32.mrf.mxu0
  %v466 = vadd.f32 0.0, %v465
  %v467 = vpop.f32.mrf.mxu0
  %468 = vdwg.mxu0
  %469 = vrot.lane.b32.xlu0 %v356, 96
  %v470 = vpop.permute.xlu0 %469
  %v472 = vsel %vm196, %v447, 0
  %v475 = vsel %vm224, %v470, 0
  %477 = vmatpush.bf16.msra.mxu0 0
  %478 = vmatpush.bf16.msra.mxu0 0
  %479 = vmatpush.bf16.msra.mxu0 0
  %480 = vmatpush.bf16.msra.mxu0 0
  %481 = vmatpush.bf16.msra.mxu0 0
  %482 = vmatpush.bf16.msra.mxu0 0
  %483 = vmatpush.bf16.msra.mxu0 0
  %484 = vmatpush.bf16.msra.mxu0 %v475
  %485 = vmatmul.bf16.gmra.mxu0 %v472
  %v486 = vpop.f32.mrf.mxu0
  %v487 = vadd.f32 0.0, %v486
  %v488 = vpop.f32.mrf.mxu0
  %489 = vdwg.mxu0
  %490 = vrot.lane.b32.xlu0 %v149, 80
  %v491 = vpop.permute.xlu0 %490
  %492 = vrot.lane.b32.xlu0 %v149, 16
  %v493 = vpop.permute.xlu0 %492
  %v495 = vsel %vm152, %v491, 0
  %v498 = vsel %vm152, %v493, 0
  %500 = vmatpush.bf16.xpose.msra.mxu0 0
  %501 = vmatpush.bf16.xpose.msra.mxu0 0
  %502 = vmatpush.bf16.xpose.msra.mxu0 0
  %503 = vmatpush.bf16.xpose.msra.mxu0 0
  %504 = vmatpush.bf16.xpose.msra.mxu0 0
  %505 = vmatpush.bf16.xpose.msra.mxu0 0
  %506 = vmatpush.bf16.xpose.msra.mxu0 0
  %507 = vmatpush.bf16.xpose.msra.mxu0 %v498
  %508 = vmatmul.bf16.gmra.mxu0 %v495
  %v509 = vpop.f32.mrf.mxu0
  %v510 = vadd.f32 %v143, %v509
  %v511 = vpop.f32.mrf.mxu0
  %512 = vdwg.mxu0
  %513 = vrot.lane.b32.xlu0 %v174, 80
  %v514 = vpop.permute.xlu0 %513
  %515 = vrot.lane.b32.xlu0 %v174, 16
  %v516 = vpop.permute.xlu0 %515
  %v518 = vsel %vm152, %v514, 0
  %v521 = vsel %vm152, %v516, 0
  %523 = vmatpush.bf16.xpose.msra.mxu0 0
  %524 = vmatpush.bf16.xpose.msra.mxu0 0
  %525 = vmatpush.bf16.xpose.msra.mxu0 0
  %526 = vmatpush.bf16.xpose.msra.mxu0 0
  %527 = vmatpush.bf16.xpose.msra.mxu0 0
  %528 = vmatpush.bf16.xpose.msra.mxu0 0
  %529 = vmatpush.bf16.xpose.msra.mxu0 0
  %530 = vmatpush.bf16.xpose.msra.mxu0 %v521
  %531 = vmatmul.bf16.gmra.mxu0 %v518
  %v532 = vpop.f32.mrf.mxu0
  %v533 = vadd.f32 %v144, %v532
  %v534 = vpop.f32.mrf.mxu0
  %535 = vdwg.mxu0
  %v536 = vsel %vm196, %v510, -inf
  %537 = vmax.xlane.f32.xlu0 %v536
  %v538 = vpop.xlane.xlu0 %537
  %v539 = vsel %vm196, %v533, -inf
  %540 = vmax.xlane.f32.xlu0 %v539
  %v541 = vpop.xlane.xlu0 %540
  %v542 = vsub.f32 %v510, %v538
  %v543 = vsub.f32 %v533, %v541
  %v544 = vmul.f32 %v542, 1.442695
  %v545 = vpow.pop %v544
  %v546 = vmul.f32 %v543, 1.442695
  %v547 = vpow.pop %v546
  %v548 = vsel %vm196, %v545, 0.0
  %549 = vadd.xlane.f32.xlu0 %v548
  %v550 = vpop.xlane.xlu0 %549
  %v551 = vsel %vm196, %v547, 0.0
  %552 = vadd.xlane.f32.xlu0 %v551
  %v553 = vpop.xlane.xlu0 %552
  %v554 = vrcp.pop %v550
  %v555 = vrcp.pop %v553
  %v556 = vmul.f32 %v545, %v554
  %v557 = vmul.f32 %v547, %v555
  %v558 = vpack.c.bf16 %v556, %v556
  %v559 = vpack.c.bf16 %v557, %v557
  %560 = vrot.lane.b32.xlu0 %v332, 80
  %v561 = vpop.permute.xlu0 %560
  %v563 = vsel %vm196, %v558, 0
  %v566 = vsel %vm224, %v561, 0
  %568 = vmatpush.bf16.msra.mxu0 0
  %569 = vmatpush.bf16.msra.mxu0 0
  %570 = vmatpush.bf16.msra.mxu0 0
  %571 = vmatpush.bf16.msra.mxu0 0
  %572 = vmatpush.bf16.msra.mxu0 0
  %573 = vmatpush.bf16.msra.mxu0 0
  %574 = vmatpush.bf16.msra.mxu0 0
  %575 = vmatpush.bf16.msra.mxu0 %v566
  %576 = vmatmul.bf16.gmra.mxu0 %v563
  %v577 = vpop.f32.mrf.mxu0
  %v578 = vadd.f32 0.0, %v577
  %v579 = vpop.f32.mrf.mxu0
  %580 = vdwg.mxu0
  %581 = vrot.lane.b32.xlu0 %v356, 80
  %v582 = vpop.permute.xlu0 %581
  %v584 = vsel %vm196, %v559, 0
  %v587 = vsel %vm224, %v582, 0
  %589 = vmatpush.bf16.msra.mxu0 0
  %590 = vmatpush.bf16.msra.mxu0 0
  %591 = vmatpush.bf16.msra.mxu0 0
  %592 = vmatpush.bf16.msra.mxu0 0
  %593 = vmatpush.bf16.msra.mxu0 0
  %594 = vmatpush.bf16.msra.mxu0 0
  %595 = vmatpush.bf16.msra.mxu0 0
  %596 = vmatpush.bf16.msra.mxu0 %v587
  %597 = vmatmul.bf16.gmra.mxu0 %v584
  %v598 = vpop.f32.mrf.mxu0
  %v599 = vadd.f32 0.0, %v598
  %v600 = vpop.f32.mrf.mxu0
  %601 = vdwg.mxu0
  %604 = vrot.lane.b32.xlu0 %v351, 16
  %v605 = vpop.permute.xlu0 %604
  %606 = vrot.lane.b32.xlu0 %v375, 16
  %v607 = vpop.permute.xlu0 %606
  %612 = vrot.lane.b32.xlu0 %v466, 32
  %v613 = vpop.permute.xlu0 %612
  %614 = vrot.lane.b32.xlu0 %v487, 32
  %v615 = vpop.permute.xlu0 %614
  %620 = vrot.lane.b32.xlu0 %v578, 48
  %v621 = vpop.permute.xlu0 %620
  %622 = vrot.lane.b32.xlu0 %v599, 48
  %v623 = vpop.permute.xlu0 %622
  %v626 = vsel %vm152, %v238, %v605
  %v627 = vsel %vm152, %v257, %v607
  %vm628 = vcmask 261120
  %v629 = vsel %vm628, %v626, %v613
  %v630 = vsel %vm628, %v627, %v615
  %vm631 = vcmask 392192
  %v632 = vsel %vm631, %v629, %v621
  %v633 = vsel %vm631, %v630, %v623
  %v634 = vpack.c.bf16 %v633, %v632
  %v635 = vld [vmem:[%s4] sm:$0xf]
  %v636 = vld [vmem:[%s4 + $0x4] sm:$0xf]
  %v637 = vld [vmem:[%s4 + $0x8] sm:$0xf]
  %v638 = vld [vmem:[%s4 + $0xc] sm:$0xf]
  %v639 = vld [vmem:[%s4 + $0x10] sm:$0xf]
  %v640 = vld [vmem:[%s4 + $0x14] sm:$0xf]
  %v641 = vld [vmem:[%s4 + $0x18] sm:$0xf]
  %v642 = vld [vmem:[%s4 + $0x1c] sm:$0xf]
  %v643 = vld [vmem:[%s5] sm:$0x1]
  %v645 = vperm.slane %v643, 0
  %v655 = vunpack.c.l.b16 %v635
  %v656 = vunpack.c.l.b16 %v636
  %v657 = vunpack.c.l.b16 %v637
  %v658 = vunpack.c.l.b16 %v638
  %v659 = vunpack.c.l.b16 %v639
  %v660 = vunpack.c.l.b16 %v640
  %v661 = vunpack.c.l.b16 %v641
  %v662 = vunpack.c.l.b16 %v642
  %v663 = vpack.c.b16 %v656, %v655
  %v664 = vpack.c.b16 %v658, %v657
  %v665 = vpack.c.b16 %v660, %v659
  %v666 = vpack.c.b16 %v662, %v661
  %v672 = vsel %vm105, %v634, 0
  %674 = vmatpush.bf16.msra.mxu0 0
  %675 = vmatpush.bf16.msra.mxu0 0
  %676 = vmatpush.bf16.msra.mxu0 0
  %677 = vmatpush.bf16.msra.mxu0 0
  %678 = vmatpush.bf16.msra.mxu0 %v666
  %679 = vmatpush.bf16.msra.mxu0 %v665
  %680 = vmatpush.bf16.msra.mxu0 %v664
  %681 = vmatpush.bf16.msra.mxu0 %v663
  %682 = vmatmul.bf16.gmra.mxu0 %v672
  %v683 = vpop.f32.mrf.mxu0
  %v684 = vadd.f32 %v645, %v683
  %v685 = vpop.f32.mrf.mxu0
  %v686 = vadd.f32 %v645, %v685
  %687 = vdwg.mxu0
  %v688 = vunpack.c.l.bf16 %v42
  %v689 = vunpack.c.l.bf16 %v43
  %v690 = vadd.f32 %v688, %v684
  %v691 = vadd.f32 %v689, %v686
  %v692 = vld [vmem:[%s6] sm:$0x1]
  %v693 = vld [vmem:[%s6 + $0x1] sm:$0x1]
  %v694 = vsel %vm105, %v690, 0.0
  %695 = vadd.xlane.f32.xlu0 %v694
  %v696 = vpop.xlane.xlu0 %695
  %v697 = vsel %vm105, %v691, 0.0
  %698 = vadd.xlane.f32.xlu0 %v697
  %v699 = vpop.xlane.xlu0 %698
  %v700 = vrcp.pop 64.0
  %v701 = vmul.f32 64.0, %v700
  %v702 = vsub.f32 1.0, %v701
  %v703 = vmul.f32 %v700, %v702
  %v704 = vadd.f32 %v700, %v703
  %vm705 = vweird.f32 %v700
  %v706 = vsel %vm705, %v700, %v704
  %v707 = vmul.f32 %v696, %v706
  %v708 = vmul.f32 %v699, %v706
  %v709 = vsub.f32 %v690, %v707
  %v710 = vsub.f32 %v691, %v708
  %v711 = vmul.f32 %v709, %v709
  %v712 = vmul.f32 %v710, %v710
  %v713 = vsel %vm105, %v711, 0.0
  %714 = vadd.xlane.f32.xlu0 %v713
  %v715 = vpop.xlane.xlu0 %714
  %v716 = vsel %vm105, %v712, 0.0
  %717 = vadd.xlane.f32.xlu0 %v716
  %v718 = vpop.xlane.xlu0 %717
  %v719 = vmul.f32 %v715, %v706
  %v720 = vmul.f32 %v718, %v706
  %v721 = vadd.f32 %v719, 1e-12
  %v722 = vadd.f32 %v720, 1e-12
  %v723 = vrsqrt.pop %v721
  %v724 = vmul.f32 %v723, %v721
  %v725 = vmul.f32 %v724, %v723
  %v726 = vmul.f32 0.5, %v725
  %v727 = vsub.f32 1.5, %v726
  %v728 = vmul.f32 %v723, %v727
  %vm729 = vweird.f32 %v721
  %vm730 = vweird.f32 %v723
  %vm731 = vmor %vm729, %vm730
  %v732 = vsel %vm731, %v723, %v728
  %v733 = vrsqrt.pop %v722
  %v734 = vmul.f32 %v733, %v722
  %v735 = vmul.f32 %v734, %v733
  %v736 = vmul.f32 0.5, %v735
  %v737 = vsub.f32 1.5, %v736
  %v738 = vmul.f32 %v733, %v737
  %vm739 = vweird.f32 %v722
  %vm740 = vweird.f32 %v733
  %vm741 = vmor %vm739, %vm740
  %v742 = vsel %vm741, %v733, %v738
  %v743 = vmul.f32 %v709, %v732
  %v744 = vmul.f32 %v710, %v742
  %v745 = vperm.slane %v692, 0
  %v746 = vmul.f32 %v743, %v745
  %v747 = vmul.f32 %v744, %v745
  %v748 = vperm.slane %v693, 0
  %v749 = vadd.f32 %v746, %v748
  %v750 = vadd.f32 %v747, %v748
  %v751 = vpack.c.bf16 %v750, %v749
  %v752 = vld [vmem:[%s7] sm:$0xf]
  %v753 = vld [vmem:[%s7 + $0x4] sm:$0xf]
  %v754 = vld [vmem:[%s7 + $0x8] sm:$0xf]
  %v755 = vld [vmem:[%s7 + $0xc] sm:$0xf]
  %v756 = vld [vmem:[%s7 + $0x10] sm:$0xf]
  %v757 = vld [vmem:[%s7 + $0x14] sm:$0xf]
  %v758 = vld [vmem:[%s7 + $0x18] sm:$0xf]
  %v759 = vld [vmem:[%s7 + $0x1c] sm:$0xf]
  %v760 = vld [vmem:[%s8] sm:$0x1]
  %v762 = vperm.slane %v760, 0
  %v772 = vunpack.c.l.b16 %v752
  %v773 = vunpack.c.l.b16 %v753
  %v774 = vunpack.c.l.b16 %v754
  %v775 = vunpack.c.l.b16 %v755
  %v776 = vunpack.c.l.b16 %v756
  %v777 = vunpack.c.l.b16 %v757
  %v778 = vunpack.c.l.b16 %v758
  %v779 = vunpack.c.l.b16 %v759
  %v780 = vpack.c.b16 %v773, %v772
  %v781 = vpack.c.b16 %v775, %v774
  %v782 = vpack.c.b16 %v777, %v776
  %v783 = vpack.c.b16 %v779, %v778
  %v789 = vsel %vm105, %v751, 0
  %791 = vmatpush.bf16.msra.mxu0 0
  %792 = vmatpush.bf16.msra.mxu0 0
  %793 = vmatpush.bf16.msra.mxu0 0
  %794 = vmatpush.bf16.msra.mxu0 0
  %795 = vmatpush.bf16.msra.mxu0 %v783
  %796 = vmatpush.bf16.msra.mxu0 %v782
  %797 = vmatpush.bf16.msra.mxu0 %v781
  %798 = vmatpush.bf16.msra.mxu0 %v780
  %799 = vmatmul.bf16.gmra.mxu0 %v789
  %v800 = vpop.f32.mrf.mxu0
  %v801 = vadd.f32 %v762, %v800
  %v802 = vpop.f32.mrf.mxu0
  %v803 = vadd.f32 %v762, %v802
  %804 = vdwg.mxu0
  %v805 = vmul.f32 %v801, %v801
  %v806 = vmul.f32 %v803, %v803
  %v807 = vmul.f32 %v801, %v805
  %v808 = vmul.f32 %v803, %v806
  %v809 = vmul.f32 %v807, 0.044715
  %v810 = vmul.f32 %v808, 0.044715
  %v811 = vadd.f32 %v801, %v809
  %v812 = vadd.f32 %v803, %v810
  %v813 = vmul.f32 %v811, 0.7978846
  %v814 = vmul.f32 %v812, 0.7978846
  %v815 = vtanh.pop %v813
  %v816 = vtanh.pop %v814
  %v817 = vadd.f32 %v815, 1.0
  %v818 = vadd.f32 %v816, 1.0
  %v819 = vmul.f32 %v817, 0.5
  %v820 = vmul.f32 %v818, 0.5
  %v821 = vmul.f32 %v801, %v819
  %v822 = vmul.f32 %v803, %v820
  %v823 = vpack.c.bf16 %v822, %v821
  %v824 = vld [vmem:[%s9] sm:$0xf]
  %v825 = vld [vmem:[%s9 + $0x4] sm:$0xf]
  %v826 = vld [vmem:[%s9 + $0x8] sm:$0xf]
  %v827 = vld [vmem:[%s9 + $0xc] sm:$0xf]
  %v828 = vld [vmem:[%s9 + $0x10] sm:$0xf]
  %v829 = vld [vmem:[%s9 + $0x14] sm:$0xf]
  %v830 = vld [vmem:[%s9 + $0x18] sm:$0xf]
  %v831 = vld [vmem:[%s9 + $0x1c] sm:$0xf]
  %v832 = vld [vmem:[%s9 + $0x20] sm:$0xf]
  %v833 = vld [vmem:[%s9 + $0x24] sm:$0xf]
  %v834 = vld [vmem:[%s9 + $0x28] sm:$0xf]
  %v835 = vld [vmem:[%s9 + $0x2c] sm:$0xf]
  %v836 = vld [vmem:[%s9 + $0x30] sm:$0xf]
  %v837 = vld [vmem:[%s9 + $0x34] sm:$0xf]
  %v838 = vld [vmem:[%s9 + $0x38] sm:$0xf]
  %v839 = vld [vmem:[%s9 + $0x3c] sm:$0xf]
  %v840 = vld [vmem:[%s10] sm:$0x1]
  %v842 = vperm.slane %v840, 0
  %v860 = vunpack.c.l.b16 %v824
  %v861 = vunpack.c.l.b16 %v825
  %v862 = vunpack.c.l.b16 %v826
  %v863 = vunpack.c.l.b16 %v827
  %v864 = vunpack.c.l.b16 %v828
  %v865 = vunpack.c.l.b16 %v829
  %v866 = vunpack.c.l.b16 %v830
  %v867 = vunpack.c.l.b16 %v831
  %v868 = vunpack.c.l.b16 %v832
  %v869 = vunpack.c.l.b16 %v833
  %v870 = vunpack.c.l.b16 %v834
  %v871 = vunpack.c.l.b16 %v835
  %v872 = vunpack.c.l.b16 %v836
  %v873 = vunpack.c.l.b16 %v837
  %v874 = vunpack.c.l.b16 %v838
  %v875 = vunpack.c.l.b16 %v839
  %v876 = vpack.c.b16 %v861, %v860
  %v877 = vpack.c.b16 %v863, %v862
  %v878 = vpack.c.b16 %v865, %v864
  %v879 = vpack.c.b16 %v867, %v866
  %v880 = vpack.c.b16 %v869, %v868
  %v881 = vpack.c.b16 %v871, %v870
  %v882 = vpack.c.b16 %v873, %v872
  %v883 = vpack.c.b16 %v875, %v874
  %892 = vmatpush.bf16.msra.mxu0 %v883
  %893 = vmatpush.bf16.msra.mxu0 %v882
  %894 = vmatpush.bf16.msra.mxu0 %v881
  %895 = vmatpush.bf16.msra.mxu0 %v880
  %896 = vmatpush.bf16.msra.mxu0 %v879
  %897 = vmatpush.bf16.msra.mxu0 %v878
  %898 = vmatpush.bf16.msra.mxu0 %v877
  %899 = vmatpush.bf16.msra.mxu0 %v876
  %900 = vmatmul.bf16.gmra.mxu0 %v823
  %v901 = vpop.f32.mrf.mxu0
  %v902 = vadd.f32 %v842, %v901
  %v903 = vpop.f32.mrf.mxu0
  %v904 = vadd.f32 %v842, %v903
  %905 = vdwg.mxu0
  %v906 = vadd.f32 %v749, %v902
  %v907 = vadd.f32 %v750, %v904
  %v908 = vld [vmem:[%s11] sm:$0x1]
  %v909 = vld [vmem:[%s11 + $0x1] sm:$0x1]
  %v910 = vsel %vm105, %v906, 0.0
  %911 = vadd.xlane.f32.xlu0 %v910
  %v912 = vpop.xlane.xlu0 %911
  %v913 = vsel %vm105, %v907, 0.0
  %914 = vadd.xlane.f32.xlu0 %v913
  %v915 = vpop.xlane.xlu0 %914
  %v916 = vmul.f32 %v912, %v706
  %v917 = vmul.f32 %v915, %v706
  %v918 = vsub.f32 %v906, %v916
  %v919 = vsub.f32 %v907, %v917
  %v920 = vmul.f32 %v918, %v918
  %v921 = vmul.f32 %v919, %v919
  %v922 = vsel %vm105, %v920, 0.0
  %923 = vadd.xlane.f32.xlu0 %v922
  %v924 = vpop.xlane.xlu0 %923
  %v925 = vsel %vm105, %v921, 0.0
  %926 = vadd.xlane.f32.xlu0 %v925
  %v927 = vpop.xlane.xlu0 %926
  %v928 = vmul.f32 %v924, %v706
  %v929 = vmul.f32 %v927, %v706
  %v930 = vadd.f32 %v928, 1e-12
  %v931 = vadd.f32 %v929, 1e-12
  %v932 = vrsqrt.pop %v930
  %v933 = vmul.f32 %v932, %v930
  %v934 = vmul.f32 %v933, %v932
  %v935 = vmul.f32 0.5, %v934
  %v936 = vsub.f32 1.5, %v935
  %v937 = vmul.f32 %v932, %v936
  %vm938 = vweird.f32 %v930
  %vm939 = vweird.f32 %v932
  %vm940 = vmor %vm938, %vm939
  %v941 = vsel %vm940, %v932, %v937
  %v942 = vrsqrt.pop %v931
  %v943 = vmul.f32 %v942, %v931
  %v944 = vmul.f32 %v943, %v942
  %v945 = vmul.f32 0.5, %v944
  %v946 = vsub.f32 1.5, %v945
  %v947 = vmul.f32 %v942, %v946
  %vm948 = vweird.f32 %v931
  %vm949 = vweird.f32 %v942
  %vm950 = vmor %vm948, %vm949
  %v951 = vsel %vm950, %v942, %v947
  %v952 = vmul.f32 %v918, %v941
  %v953 = vmul.f32 %v919, %v951
  %v954 = vperm.slane %v908, 0
  %v955 = vmul.f32 %v952, %v954
  %v956 = vmul.f32 %v953, %v954
  %v957 = vperm.slane %v909, 0
  %v958 = vadd.f32 %v955, %v957
  %v959 = vadd.f32 %v956, %v957
  %v960 = vpack.c.bf16 %v958, %v958
  %v961 = vpack.c.bf16 %v959, %v959
  %vm962 = vcmask 519168
  %963 = vst.msk [vmem:[%s12] sm:$0xf] %vm962, %v960
  %964 = vst.msk [vmem:[%s12 + $0x4] sm:$0xf] %vm962, %v961
  // Predicated region
  $region50: #{forward.3} parent=0 // pred_check
    _
  $region51: #{forward.3} parent=0 // pred_check_branch
    %966 = sbr.rel (0) target = $region53
  $region52: #{forward.3} parent=0 // pred_region
    _
  $region53: #{forward.3} parent=0 // pred_fallthru
    _
  // Predicated region
  $region54: #{forward.3} parent=0 // pred_check
    _
  $region55: #{forward.3} parent=0 // pred_check_branch
    %968 = sbr.rel (0) target = $region57
  $region56: #{forward.3} parent=0 // pred_region
    _
  $region57: #{forward.3} parent=0 // pred_fallthru
    _

</llo_original>
